<compile_context>
chip_gen: v7x
topology: tpu7x:2x2x1
jax: 0.10.0
libtpu: 0.0.40
codegen_flags: <defaults>
</compile_context>

<pallas_src>
import jax
import jax.numpy as jnp
from jax import lax
from jax.experimental import pallas as pl
from jax.experimental.pallas import tpu as pltpu

KSIZE = 7      # conv1 kernel size
PAD = 3        # conv1 padding
STRIDE = 4     # conv2 stride (and upsample factor)
MID_CH = 16    # hidden channels
UPSCALE = 4
BN_EPS = 1e-5


def _fcn_kernel(pk_ref, w1_ref, b1_ref, w2_ref, b2_ref, up_ref, w3_ref, b3_ref, o_ref):
    # pk_ref : (1, K, S)   im2col patches of the stride-4 7x7 conv; low-res spatial S
    #                      = h_lo*w_lo sits on lanes (channel-major layout).
    # w1_ref : (16, K)     conv1 weights with BatchNorm (eval) folded in.
    # b1_ref : (16, 1)     conv1+BN bias column (broadcasts over lanes).
    # w2_ref : (16, 16)    conv2 1x1 weights.
    # b2_ref : (16, 1)     conv2 bias column.
    # up_ref : (S, P)      bilinear x4 interpolation matrix, P = Hup*Wup (lane-dense).
    # w3_ref : (16,) SMEM  conv3 (16 -> 1) weights, applied as scalar-broadcast VPU MACs.
    # b3_ref : (1,)  SMEM  conv3 bias.
    # o_ref  : (1, 1, P)   lane-dense output row for this batch element.
    pk = pk_ref[0]                                                       # (K, S)

    # conv1 (7x7, stride 4 via the patch gather) + folded BatchNorm, then ReLU.
    z = jnp.dot(w1_ref[...], pk, preferred_element_type=jnp.float32) + b1_ref[...]
    z = jnp.maximum(z, 0.0)                                              # (16, S)

    # conv2 (1x1).
    g = jnp.dot(w2_ref[...], z, preferred_element_type=jnp.float32) + b2_ref[...]

    # conv3 (1x1, 16 -> 1): weighted channel sum on the VPU with SMEM scalar weights.
    q = w3_ref[0] * g[0:1, :]
    for o in range(1, MID_CH):
        q = q + w3_ref[o] * g[o:o + 1, :]                                # (1, S)

    # Bilinear x4 upsample as a single lane-dense matmul, then the conv3 bias.
    out = jnp.dot(q, up_ref[...], preferred_element_type=jnp.float32) + b3_ref[0]
    o_ref[0] = out.astype(o_ref.dtype)                                   # (1, P)


def _interp_matrix_1d(size_in, factor):
    """PyTorch bilinear (align_corners=False) 1-D interpolation matrix (size_in*factor, size_in)."""
    size_out = size_in * factor
    i = jnp.arange(size_out, dtype=jnp.float32)
    src = jnp.maximum((i + 0.5) / factor - 0.5, 0.0)
    i0 = jnp.floor(src).astype(jnp.int32)
    i1 = jnp.minimum(i0 + 1, size_in - 1)
    lam = src - i0.astype(jnp.float32)
    rows = jnp.arange(size_out)
    u = jnp.zeros((size_out, size_in), jnp.float32)
    u = u.at[rows, i0].add(1.0 - lam)
    u = u.at[rows, i1].add(lam)
    return u


def simpler_fcn_forward(x, params):
    """Forward pass of SimplerFCNwBottleneck. BatchNorm uses running (eval) statistics."""
    # TODO(synk): training-mode BatchNorm (batch statistics over the full-res conv1 output)
    # is not implemented; eval-mode stats are folded into the conv1 weights/bias.
    w1, b1 = params["conv1_w"], params["conv1_b"]
    gamma, beta = params["bn_gamma"], params["bn_beta"]
    mean, var = params["bn_mean"], params["bn_var"]
    w2, b2 = params["conv2_w"], params["conv2_b"]
    w3, b3 = params["conv3_w"], params["conv3_b"]

    N, C, H, W = x.shape
    h_lo = (H - 1) // STRIDE + 1                     # spatial after the stride-4 1x1 conv
    w_lo = (W - 1) // STRIDE + 1
    S = h_lo * w_lo
    Hu, Wu = UPSCALE * h_lo, UPSCALE * w_lo
    P = Hu * Wu                                      # lane-dense output width (mult of 128 here)
    K = C * KSIZE * KSIZE

    # ---- fold BatchNorm (eval) into conv1; reshape params to matmul layouts ----------
    bn_scale = gamma / jnp.sqrt(var + BN_EPS)
    w1f = (w1 * bn_scale[:, None, None, None]).reshape(MID_CH, K)
    b1f = ((b1 - mean) * bn_scale + beta).reshape(MID_CH, 1)
    w2m = w2.reshape(MID_CH, MID_CH)
    b2c = b2.reshape(MID_CH, 1)
    w3v = w3.reshape(MID_CH)                         # -> SMEM scalars
    b3v = b3.reshape(1)                              # -> SMEM scalar

    # ---- bilinear x4 upsample (align_corners=False) as one (S, P) matrix --------------
    uh = _interp_matrix_1d(h_lo, UPSCALE)            # (Hu, h_lo)
    uw = _interp_matrix_1d(w_lo, UPSCALE)            # (Wu, w_lo)
    upmat = jnp.einsum("pi,qj->ijpq", uh, uw).reshape(S, P)

    # ---- im2col of the stride-4 7x7 conv (zero padding 3); NCHW layout preserved ------
    # TODO(synk): for large H,W gather these patches in-kernel (manual DMA over spatial
    # tiles) instead of materialising the ~3x patch tensor through HBM here.
    xpad = jnp.pad(x, ((0, 0), (0, 0), (PAD, PAD), (PAD, PAD)))
    taps = []
    for kh in range(KSIZE):
        for kw in range(KSIZE):
            taps.append(xpad[:, :,
                             kh:kh + STRIDE * (h_lo - 1) + 1:STRIDE,
                             kw:kw + STRIDE * (w_lo - 1) + 1:STRIDE])
    pk = jnp.stack(taps, axis=2).reshape(N, K, S)    # (N, C*49, h_lo*w_lo)

    grid_spec = pltpu.PrefetchScalarGridSpec(
        num_scalar_prefetch=0,
        grid=(N,),
        in_specs=[
            pl.BlockSpec((1, K, S), lambda n: (n, 0, 0)),            # patches (per batch)
            pl.BlockSpec((MID_CH, K), lambda n: (0, 0)),             # conv1+BN weights
            pl.BlockSpec((MID_CH, 1), lambda n: (0, 0)),             # conv1+BN bias
            pl.BlockSpec((MID_CH, MID_CH), lambda n: (0, 0)),        # conv2 weights
            pl.BlockSpec((MID_CH, 1), lambda n: (0, 0)),             # conv2 bias
            pl.BlockSpec((S, P), lambda n: (0, 0)),                  # upsample matrix
            pl.BlockSpec(memory_space=pltpu.MemorySpace.SMEM),       # conv3 weights (SMEM)
            pl.BlockSpec(memory_space=pltpu.MemorySpace.SMEM),       # conv3 bias (SMEM)
        ],
        out_specs=pl.BlockSpec((1, 1, P), lambda n: (n, 0, 0)),      # lane-dense output row
    )

    out_flat = pl.pallas_call(
        _fcn_kernel,
        out_shape=jax.ShapeDtypeStruct((N, 1, P), jnp.float32),
        grid_spec=grid_spec,
        compiler_params=pltpu.CompilerParams(
            dimension_semantics=("parallel",),
            vmem_limit_bytes=32 * 1024 * 1024,
        ),
    )(pk, w1f, b1f, w2m, b2c, upmat, w3v, b3v)

    out = out_flat.reshape(N, 1, Hu, Wu)             # contiguous reshape, no transpose

    # ---- F.pad(..., mode='reflect') back to the input spatial size --------------------
    hdif, wdif = H - Hu, W - Wu
    if hdif == 0 and wdif == 0:
        return out
    top, bottom = hdif // 2, hdif - hdif // 2
    left, right = wdif // 2, wdif - wdif // 2
    if hdif >= 0 and wdif >= 0:
        return jnp.pad(out, ((0, 0), (0, 0), (top, bottom), (left, right)), mode="reflect")
    return out[:, :, -top:Hu + bottom, -left:Wu + right]   # negative pad == crop


# ------------------------- plain-JAX reference (unfused) -------------------------------
def _upsample_bilinear_ref(y, factor):
    n, c, h, w = y.shape

    def src_idx(size_in, size_out):
        i = jnp.arange(size_out, dtype=jnp.float32)
        s = jnp.maximum((i + 0.5) / factor - 0.5, 0.0)
        i0 = jnp.floor(s).astype(jnp.int32)
        i1 = jnp.minimum(i0 + 1, size_in - 1)
        return i0, i1, s - i0.astype(jnp.float32)

    i0, i1, lh = src_idx(h, h * factor)
    j0, j1, lw = src_idx(w, w * factor)
    rows = (y[:, :, i0, :] * (1.0 - lh)[None, None, :, None]
            + y[:, :, i1, :] * lh[None, None, :, None])
    return (rows[:, :, :, j0] * (1.0 - lw)[None, None, None, :]
            + rows[:, :, :, j1] * lw[None, None, None, :])


def reference_forward(x, params):
    w1, b1 = params["conv1_w"], params["conv1_b"]
    gamma, beta = params["bn_gamma"], params["bn_beta"]
    mean, var = params["bn_mean"], params["bn_var"]
    w2, b2 = params["conv2_w"], params["conv2_b"]
    w3, b3 = params["conv3_w"], params["conv3_b"]
    dn = ("NCHW", "OIHW", "NCHW")

    y = lax.conv_general_dilated(x, w1, (1, 1), ((PAD, PAD), (PAD, PAD)),
                                 dimension_numbers=dn) + b1[None, :, None, None]
    y = (y - mean[None, :, None, None]) / jnp.sqrt(var[None, :, None, None] + BN_EPS)
    y = y * gamma[None, :, None, None] + beta[None, :, None, None]
    y = jnp.maximum(y, 0.0)
    y = lax.conv_general_dilated(y, w2, (STRIDE, STRIDE), "VALID",
                                 dimension_numbers=dn) + b2[None, :, None, None]
    y = _upsample_bilinear_ref(y, UPSCALE)
    y = lax.conv_general_dilated(y, w3, (1, 1), "VALID",
                                 dimension_numbers=dn) + b3[None, :, None, None]

    N, _, H, W = x.shape
    _, _, Hu, Wu = y.shape
    hdif, wdif = H - Hu, W - Wu
    if hdif == 0 and wdif == 0:
        return y
    top, bottom = hdif // 2, hdif - hdif // 2
    left, right = wdif // 2, wdif - wdif // 2
    if hdif >= 0 and wdif >= 0:
        return jnp.pad(y, ((0, 0), (0, 0), (top, bottom), (left, right)), mode="reflect")
    return y[:, :, -top:Hu + bottom, -left:Wu + right]


if __name__ == "__main__":
    # Keep f32 matmuls/convs at full precision on the MXU (kernel and reference alike).
    jax.config.update("jax_default_matmul_precision", "highest")

    N, C, H, W = 2, 4, 16, 16
    keys = jax.random.split(jax.random.PRNGKey(0), 10)

    x = jax.random.normal(keys[0], (N, C, H, W), dtype=jnp.float32)

    def uni(k, shape, bound):
        return jax.random.uniform(k, shape, jnp.float32, -bound, bound)

    fan1 = C * KSIZE * KSIZE
    fan2 = MID_CH
    params = {
        "conv1_w": uni(keys[1], (MID_CH, C, KSIZE, KSIZE), 1.0 / fan1 ** 0.5),
        "conv1_b": uni(keys[2], (MID_CH,), 1.0 / fan1 ** 0.5),
        "bn_gamma": jax.random.uniform(keys[3], (MID_CH,), jnp.float32, 0.5, 1.5),
        "bn_beta": uni(keys[4], (MID_CH,), 0.5),
        "bn_mean": uni(keys[5], (MID_CH,), 0.5),
        "bn_var": jax.random.uniform(keys[6], (MID_CH,), jnp.float32, 0.5, 1.5),
        "conv2_w": uni(keys[7], (MID_CH, MID_CH, 1, 1), 1.0 / fan2 ** 0.5),
        "conv2_b": uni(keys[8], (MID_CH,), 1.0 / fan2 ** 0.5),
        "conv3_w": uni(keys[9], (1, MID_CH, 1, 1), 1.0 / fan2 ** 0.5),
        "conv3_b": jnp.asarray([0.1], jnp.float32),
    }

    out = jax.block_until_ready(jax.jit(simpler_fcn_forward)(x, params))
    ref = jax.block_until_ready(jax.jit(reference_forward)(x, params))

    assert out.shape == (N, 1, H, W), out.shape
    max_err = float(jnp.max(jnp.abs(out - ref)))
    assert jnp.allclose(out, ref, atol=1e-3, rtol=1e-3), max_err

    print("KERNEL_OK")
</pallas_src>

<mosaic_0001>
module attributes {stable_mosaic.version = 11 : i64} {
  func.func private @main(%arg0: i32) attributes {dimension_semantics = [#tpu.dimension_semantics<core_parallel>], iteration_bounds = array<i64: 2>, tpu.core_type = #tpu.core_type<sc_scalar_subcore>, window_params = []} {
    return
  }
}

module attributes {stable_mosaic.version = 11 : i64} {
  func.func private @main(%arg0: i32) attributes {dimension_semantics = [#tpu.dimension_semantics<core_parallel>], iteration_bounds = array<i64: 2>, tpu.core_type = #tpu.core_type<sc_scalar_subcore>, window_params = []} {
    return
  }
}

module attributes {stable_mosaic.version = 11 : i64} {
  func.func @_fcn_kernel(%arg0: i32, %arg1: memref<1x196x16xf32, #tpu.memory_space<vmem>>, %arg2: memref<16x196xf32, #tpu.memory_space<vmem>>, %arg3: memref<16x1xf32, #tpu.memory_space<vmem>>, %arg4: memref<16x16xf32, #tpu.memory_space<vmem>>, %arg5: memref<16x1xf32, #tpu.memory_space<vmem>>, %arg6: memref<16x256xf32, #tpu.memory_space<vmem>>, %arg7: memref<16xf32, #tpu.memory_space<smem>>, %arg8: memref<1xf32, #tpu.memory_space<smem>>, %arg9: memref<1x1x256xf32, #tpu.memory_space<vmem>>) attributes {dimension_semantics = [#tpu.dimension_semantics<parallel>], iteration_bounds = array<i64: 2>, scalar_prefetch = 0 : i64, scratch_operands = 0 : i64, tpu.core_type = #tpu.core_type<tc>, window_params = [{transform_indices = @transform_0, window_bounds = array<i64: 1, 196, 16>}, {pipeline_mode = #tpu.pipeline_mode<synchronous>, transform_indices = @transform_1, window_bounds = array<i64: 16, 196>}, {pipeline_mode = #tpu.pipeline_mode<synchronous>, transform_indices = @transform_2, window_bounds = array<i64: 16, 1>}, {pipeline_mode = #tpu.pipeline_mode<synchronous>, transform_indices = @transform_3, window_bounds = array<i64: 16, 16>}, {pipeline_mode = #tpu.pipeline_mode<synchronous>, transform_indices = @transform_4, window_bounds = array<i64: 16, 1>}, {pipeline_mode = #tpu.pipeline_mode<synchronous>, transform_indices = @transform_5, window_bounds = array<i64: 16, 256>}, {transform_indices = @transform_6, window_bounds = array<i64: 16>}, {transform_indices = @transform_7, window_bounds = array<i64: 1>}, {transform_indices = @transform_8, window_bounds = array<i64: 1, 1, 256>}]} {
    %c0 = arith.constant 0 : index
    %c0_0 = arith.constant 0 : index
    %c0_1 = arith.constant 0 : index
    %0 = vector.load %arg1[%c0, %c0_0, %c0_1] : memref<1x196x16xf32, #tpu.memory_space<vmem>>, vector<1x196x16xf32>
    %1 = vector.shape_cast %0 : vector<1x196x16xf32> to vector<196x16xf32>
    %c0_2 = arith.constant 0 : index
    %c0_3 = arith.constant 0 : index
    %2 = vector.load %arg2[%c0_2, %c0_3] : memref<16x196xf32, #tpu.memory_space<vmem>>, vector<16x196xf32>
    %cst = arith.constant dense<0.000000e+00> : vector<16x16xf32>
    %3 = tpu.matmul %2, %1, %cst {dimension_numbers = #tpu.dot_dimension_numbers<[1], [0], [0], [1], [0, 0, 1, 1], [], []>, precision = #tpu.contract_precision<fp32>} : vector<16x196xf32>, vector<196x16xf32>, vector<16x16xf32> -> vector<16x16xf32>
    %c0_4 = arith.constant 0 : index
    %c0_5 = arith.constant 0 : index
    %4 = vector.load %arg3[%c0_4, %c0_5] : memref<16x1xf32, #tpu.memory_space<vmem>>, vector<16x1xf32>
    %5 = vector.broadcast %4 : vector<16x1xf32> to vector<16x16xf32>
    %6 = arith.addf %3, %5 : vector<16x16xf32>
    %cst_6 = arith.constant 0.000000e+00 : f32
    %7 = vector.broadcast %cst_6 : f32 to vector<16x16xf32>
    %8 = arith.maximumf %6, %7 : vector<16x16xf32>
    %c0_7 = arith.constant 0 : index
    %c0_8 = arith.constant 0 : index
    %9 = vector.load %arg4[%c0_7, %c0_8] : memref<16x16xf32, #tpu.memory_space<vmem>>, vector<16x16xf32>
    %cst_9 = arith.constant dense<0.000000e+00> : vector<16x16xf32>
    %10 = tpu.matmul %9, %8, %cst_9 {dimension_numbers = #tpu.dot_dimension_numbers<[1], [0], [0], [1], [0, 0, 1, 1], [], []>, precision = #tpu.contract_precision<fp32>} : vector<16x16xf32>, vector<16x16xf32>, vector<16x16xf32> -> vector<16x16xf32>
    %c0_10 = arith.constant 0 : index
    %c0_11 = arith.constant 0 : index
    %11 = vector.load %arg5[%c0_10, %c0_11] : memref<16x1xf32, #tpu.memory_space<vmem>>, vector<16x1xf32>
    %12 = vector.broadcast %11 : vector<16x1xf32> to vector<16x16xf32>
    %13 = arith.addf %10, %12 : vector<16x16xf32>
    %c0_12 = arith.constant 0 : index
    %14 = memref.load %arg7[%c0_12] : memref<16xf32, #tpu.memory_space<smem>>
    %15 = vector.extract_strided_slice %13 {offsets = [0, 0], sizes = [1, 16], strides = [1, 1]} : vector<16x16xf32> to vector<1x16xf32>
    %16 = vector.broadcast %14 : f32 to vector<1x16xf32>
    %17 = arith.mulf %16, %15 : vector<1x16xf32>
    %c1 = arith.constant 1 : index
    %18 = memref.load %arg7[%c1] : memref<16xf32, #tpu.memory_space<smem>>
    %19 = vector.extract_strided_slice %13 {offsets = [1, 0], sizes = [1, 16], strides = [1, 1]} : vector<16x16xf32> to vector<1x16xf32>
    %20 = vector.broadcast %18 : f32 to vector<1x16xf32>
    %21 = arith.mulf %20, %19 : vector<1x16xf32>
    %22 = arith.addf %17, %21 : vector<1x16xf32>
    %c2 = arith.constant 2 : index
    %23 = memref.load %arg7[%c2] : memref<16xf32, #tpu.memory_space<smem>>
    %24 = vector.extract_strided_slice %13 {offsets = [2, 0], sizes = [1, 16], strides = [1, 1]} : vector<16x16xf32> to vector<1x16xf32>
    %25 = vector.broadcast %23 : f32 to vector<1x16xf32>
    %26 = arith.mulf %25, %24 : vector<1x16xf32>
    %27 = arith.addf %22, %26 : vector<1x16xf32>
    %c3 = arith.constant 3 : index
    %28 = memref.load %arg7[%c3] : memref<16xf32, #tpu.memory_space<smem>>
    %29 = vector.extract_strided_slice %13 {offsets = [3, 0], sizes = [1, 16], strides = [1, 1]} : vector<16x16xf32> to vector<1x16xf32>
    %30 = vector.broadcast %28 : f32 to vector<1x16xf32>
    %31 = arith.mulf %30, %29 : vector<1x16xf32>
    %32 = arith.addf %27, %31 : vector<1x16xf32>
    %c4 = arith.constant 4 : index
    %33 = memref.load %arg7[%c4] : memref<16xf32, #tpu.memory_space<smem>>
    %34 = vector.extract_strided_slice %13 {offsets = [4, 0], sizes = [1, 16], strides = [1, 1]} : vector<16x16xf32> to vector<1x16xf32>
    %35 = vector.broadcast %33 : f32 to vector<1x16xf32>
    %36 = arith.mulf %35, %34 : vector<1x16xf32>
    %37 = arith.addf %32, %36 : vector<1x16xf32>
    %c5 = arith.constant 5 : index
    %38 = memref.load %arg7[%c5] : memref<16xf32, #tpu.memory_space<smem>>
    %39 = vector.extract_strided_slice %13 {offsets = [5, 0], sizes = [1, 16], strides = [1, 1]} : vector<16x16xf32> to vector<1x16xf32>
    %40 = vector.broadcast %38 : f32 to vector<1x16xf32>
    %41 = arith.mulf %40, %39 : vector<1x16xf32>
    %42 = arith.addf %37, %41 : vector<1x16xf32>
    %c6 = arith.constant 6 : index
    %43 = memref.load %arg7[%c6] : memref<16xf32, #tpu.memory_space<smem>>
    %44 = vector.extract_strided_slice %13 {offsets = [6, 0], sizes = [1, 16], strides = [1, 1]} : vector<16x16xf32> to vector<1x16xf32>
    %45 = vector.broadcast %43 : f32 to vector<1x16xf32>
    %46 = arith.mulf %45, %44 : vector<1x16xf32>
    %47 = arith.addf %42, %46 : vector<1x16xf32>
    %c7 = arith.constant 7 : index
    %48 = memref.load %arg7[%c7] : memref<16xf32, #tpu.memory_space<smem>>
    %49 = vector.extract_strided_slice %13 {offsets = [7, 0], sizes = [1, 16], strides = [1, 1]} : vector<16x16xf32> to vector<1x16xf32>
    %50 = vector.broadcast %48 : f32 to vector<1x16xf32>
    %51 = arith.mulf %50, %49 : vector<1x16xf32>
    %52 = arith.addf %47, %51 : vector<1x16xf32>
    %c8 = arith.constant 8 : index
    %53 = memref.load %arg7[%c8] : memref<16xf32, #tpu.memory_space<smem>>
    %54 = vector.extract_strided_slice %13 {offsets = [8, 0], sizes = [1, 16], strides = [1, 1]} : vector<16x16xf32> to vector<1x16xf32>
    %55 = vector.broadcast %53 : f32 to vector<1x16xf32>
    %56 = arith.mulf %55, %54 : vector<1x16xf32>
    %57 = arith.addf %52, %56 : vector<1x16xf32>
    %c9 = arith.constant 9 : index
    %58 = memref.load %arg7[%c9] : memref<16xf32, #tpu.memory_space<smem>>
    %59 = vector.extract_strided_slice %13 {offsets = [9, 0], sizes = [1, 16], strides = [1, 1]} : vector<16x16xf32> to vector<1x16xf32>
    %60 = vector.broadcast %58 : f32 to vector<1x16xf32>
    %61 = arith.mulf %60, %59 : vector<1x16xf32>
    %62 = arith.addf %57, %61 : vector<1x16xf32>
    %c10 = arith.constant 10 : index
    %63 = memref.load %arg7[%c10] : memref<16xf32, #tpu.memory_space<smem>>
    %64 = vector.extract_strided_slice %13 {offsets = [10, 0], sizes = [1, 16], strides = [1, 1]} : vector<16x16xf32> to vector<1x16xf32>
    %65 = vector.broadcast %63 : f32 to vector<1x16xf32>
    %66 = arith.mulf %65, %64 : vector<1x16xf32>
    %67 = arith.addf %62, %66 : vector<1x16xf32>
    %c11 = arith.constant 11 : index
    %68 = memref.load %arg7[%c11] : memref<16xf32, #tpu.memory_space<smem>>
    %69 = vector.extract_strided_slice %13 {offsets = [11, 0], sizes = [1, 16], strides = [1, 1]} : vector<16x16xf32> to vector<1x16xf32>
    %70 = vector.broadcast %68 : f32 to vector<1x16xf32>
    %71 = arith.mulf %70, %69 : vector<1x16xf32>
    %72 = arith.addf %67, %71 : vector<1x16xf32>
    %c12 = arith.constant 12 : index
    %73 = memref.load %arg7[%c12] : memref<16xf32, #tpu.memory_space<smem>>
    %74 = vector.extract_strided_slice %13 {offsets = [12, 0], sizes = [1, 16], strides = [1, 1]} : vector<16x16xf32> to vector<1x16xf32>
    %75 = vector.broadcast %73 : f32 to vector<1x16xf32>
    %76 = arith.mulf %75, %74 : vector<1x16xf32>
    %77 = arith.addf %72, %76 : vector<1x16xf32>
    %c13 = arith.constant 13 : index
    %78 = memref.load %arg7[%c13] : memref<16xf32, #tpu.memory_space<smem>>
    %79 = vector.extract_strided_slice %13 {offsets = [13, 0], sizes = [1, 16], strides = [1, 1]} : vector<16x16xf32> to vector<1x16xf32>
    %80 = vector.broadcast %78 : f32 to vector<1x16xf32>
    %81 = arith.mulf %80, %79 : vector<1x16xf32>
    %82 = arith.addf %77, %81 : vector<1x16xf32>
    %c14 = arith.constant 14 : index
    %83 = memref.load %arg7[%c14] : memref<16xf32, #tpu.memory_space<smem>>
    %84 = vector.extract_strided_slice %13 {offsets = [14, 0], sizes = [1, 16], strides = [1, 1]} : vector<16x16xf32> to vector<1x16xf32>
    %85 = vector.broadcast %83 : f32 to vector<1x16xf32>
    %86 = arith.mulf %85, %84 : vector<1x16xf32>
    %87 = arith.addf %82, %86 : vector<1x16xf32>
    %c15 = arith.constant 15 : index
    %88 = memref.load %arg7[%c15] : memref<16xf32, #tpu.memory_space<smem>>
    %89 = vector.extract_strided_slice %13 {offsets = [15, 0], sizes = [1, 16], strides = [1, 1]} : vector<16x16xf32> to vector<1x16xf32>
    %90 = vector.broadcast %88 : f32 to vector<1x16xf32>
    %91 = arith.mulf %90, %89 : vector<1x16xf32>
    %92 = arith.addf %87, %91 : vector<1x16xf32>
    %c0_13 = arith.constant 0 : index
    %c0_14 = arith.constant 0 : index
    %93 = vector.load %arg6[%c0_13, %c0_14] : memref<16x256xf32, #tpu.memory_space<vmem>>, vector<16x256xf32>
    %cst_15 = arith.constant dense<0.000000e+00> : vector<1x256xf32>
    %94 = tpu.matmul %92, %93, %cst_15 {dimension_numbers = #tpu.dot_dimension_numbers<[1], [0], [0], [1], [0, 0, 1, 1], [], []>, precision = #tpu.contract_precision<fp32>} : vector<1x16xf32>, vector<16x256xf32>, vector<1x256xf32> -> vector<1x256xf32>
    %c0_16 = arith.constant 0 : index
    %95 = memref.load %arg8[%c0_16] : memref<1xf32, #tpu.memory_space<smem>>
    %96 = vector.broadcast %95 : f32 to vector<1x256xf32>
    %97 = arith.addf %94, %96 : vector<1x256xf32>
    %c0_17 = arith.constant 0 : index
    %c0_18 = arith.constant 0 : index
    %c0_19 = arith.constant 0 : index
    %98 = vector.load %arg9[%c0_17, %c0_18, %c0_19] : memref<1x1x256xf32, #tpu.memory_space<vmem>>, vector<1x1x256xf32>
    %99 = vector.shape_cast %98 : vector<1x1x256xf32> to vector<1x256xf32>
    %100 = vector.shape_cast %97 : vector<1x256xf32> to vector<1x1x256xf32>
    tpu.vector_store %arg9[%c0_17, %c0_18, %c0_19], %100 {strides = array<i32>} : memref<1x1x256xf32, #tpu.memory_space<vmem>>, vector<1x1x256xf32>,
    return
  }
  func.func @transform_0(%arg0: i32) -> (i32, i32, i32) {
    %c0_i32 = arith.constant 0 : i32
    %c0_i32_0 = arith.constant 0 : i32
    %c0_i32_1 = arith.constant 0 : i32
    return %arg0, %c0_i32, %c0_i32_0 : i32, i32, i32
  }
  func.func @transform_1(%arg0: i32) -> (i32, i32) {
    %c0_i32 = arith.constant 0 : i32
    %c0_i32_0 = arith.constant 0 : i32
    %c0_i32_1 = arith.constant 0 : i32
    return %c0_i32, %c0_i32_0 : i32, i32
  }
  func.func @transform_2(%arg0: i32) -> (i32, i32) {
    %c0_i32 = arith.constant 0 : i32
    %c0_i32_0 = arith.constant 0 : i32
    %c0_i32_1 = arith.constant 0 : i32
    return %c0_i32, %c0_i32_0 : i32, i32
  }
  func.func @transform_3(%arg0: i32) -> (i32, i32) {
    %c0_i32 = arith.constant 0 : i32
    %c0_i32_0 = arith.constant 0 : i32
    %c0_i32_1 = arith.constant 0 : i32
    return %c0_i32, %c0_i32_0 : i32, i32
  }
  func.func @transform_4(%arg0: i32) -> (i32, i32) {
    %c0_i32 = arith.constant 0 : i32
    %c0_i32_0 = arith.constant 0 : i32
    %c0_i32_1 = arith.constant 0 : i32
    return %c0_i32, %c0_i32_0 : i32, i32
  }
  func.func @transform_5(%arg0: i32) -> (i32, i32) {
    %c0_i32 = arith.constant 0 : i32
    %c0_i32_0 = arith.constant 0 : i32
    %c0_i32_1 = arith.constant 0 : i32
    return %c0_i32, %c0_i32_0 : i32, i32
  }
  func.func @transform_6(%arg0: i32) -> i32 {
    %c0_i32 = arith.constant 0 : i32
    %c0_i32_0 = arith.constant 0 : i32
    return %c0_i32 : i32
  }
  func.func @transform_7(%arg0: i32) -> i32 {
    %c0_i32 = arith.constant 0 : i32
    %c0_i32_0 = arith.constant 0 : i32
    return %c0_i32 : i32
  }
  func.func @transform_8(%arg0: i32) -> (i32, i32, i32) {
    %c0_i32 = arith.constant 0 : i32
    %c0_i32_0 = arith.constant 0 : i32
    %c0_i32_1 = arith.constant 0 : i32
    return %arg0, %c0_i32, %c0_i32_0 : i32, i32, i32
  }
}

</mosaic_0001>

<llo_original>
// kernel: simpler_fcn_forward.1
$region0: #{simpler_fcn_forward.1}
  #allocation0 [shape = 'u32[]', space=smem, size = 0x4, offset = 0x4, fixed_abs, tag = 'smem constant byte address 0x4 - core index']
  #allocation1 [shape = 'u32[144,128]{1,0:T(1,128)}', space=vmem, size = 0x12000, scoped, tag = 'internal scratch']
  #allocation2 [shape = 'f32[1]{0:T(128)S(6)}', space=smem, size = 0x200, scoped, tag = 'scoped memory for simpler_fcn_forward.1']
  %s0 = inlined_call_operand.vmem [shape: f32[2,196,16], index: 0, kind: input, shape index: {}]
  %s1 = inlined_call_operand.vmem [shape: f32[16,196], index: 1, kind: input, shape index: {}]
  %s2 = inlined_call_operand.vmem [shape: f32[16,1], index: 2, kind: input, shape index: {}]
  %s3 = inlined_call_operand.vmem [shape: f32[16,16], index: 3, kind: input, shape index: {}]
  %s4 = inlined_call_operand.vmem [shape: f32[16,1], index: 4, kind: input, shape index: {}]
  %s5 = inlined_call_operand.vmem [shape: f32[16,256], index: 5, kind: input, shape index: {}]
  %s6 = inlined_call_operand.vmem [shape: f32[16], index: 6, kind: input, shape index: {}]
  %s7 = inlined_call_operand.<no memory space> [shape: f32[1], index: 7, kind: input, shape index: {}]
  %s8 = inlined_call_operand.vmem [shape: f32[2,1,256], index: 8, kind: output, shape index: {}]
  %s9 = sld [smem:[#allocation0]]
  $region69: #{simpler_fcn_forward.1} parent=0
    _
  %s11 = ssub.s32 1, %s9
  %s12 = scalar_select 0, %s11, %s9
  %13 = sst [smem:[#allocation2]] %s7
  $region1: #{simpler_fcn_forward.1} parent=0
    #allocation3 [shape = 'u8[512]{0}', space=smem, size = 0x200, scoped, tag = 'input window, operand 6, single buffered']
    #allocation4 [shape = 's32[2]{0}', space=sflag, size = 0x8, scoped, tag = 'scoped memory for simpler_fcn_forward.1']
    %14 = vsyncpa [#allocation4], 0
    loop: start=0, step=1, limit=4
    $region2: #{simpler_fcn_forward.1} parent=1 // loop_pre_header
      _
    $region3: #{simpler_fcn_forward.1} parent=1 // loop_header
      %s16 = sphi 0, %s20
      %p17 = scmp.ge.s32.totalorder %s16, 4
      %s26 = sphi 0, %s28
      %s29 = sphi 0, %s26
      %s30 = sphi 0, %s29
      %s46 = sphi 0, %s30
      %s50 = sphi 0, %s50
      %s52 = sphi 0, %s50
      %s53 = sphi 0, %s52
      %s67 = sphi 0, %s53
      %s71 = sphi 0, %s71
      %s73 = sphi 0, %s71
      %s74 = sphi 0, %s73
      %s88 = sphi 0, %s74
      %s92 = sphi 0, %s92
      %s94 = sphi 0, %s92
      %s95 = sphi 0, %s94
      %s109 = sphi 0, %s95
      %s113 = sphi 0, %s113
      %s115 = sphi 0, %s113
      %s116 = sphi 0, %s115
      %s130 = sphi 0, %s116
      %s134 = sphi 0, %s134
      %s136 = sphi 0, %s134
      %s137 = sphi 0, %s136
      %s151 = sphi 0, %s137
      %s155 = sphi 0, %s155
      %s157 = sphi 0, %s155
      %s158 = sphi 0, %s157
      %s172 = sphi 0, %s158
      %s176 = sphi 0, %s176
      %s178 = sphi 0, %s176
      %s179 = sphi 0, %s178
      %s193 = sphi 0, %s179
      %s199 = sphi 0, %s201
      %s202 = sphi 0, %s199
      %s203 = sphi 0, %s202
      %s219 = sphi 0, %s203
    $region4: #{simpler_fcn_forward.1} parent=1 // loop_header_branch
      %19 = sbr.rel (%p17) target = $region8
    $region5: #{simpler_fcn_forward.1} parent=1 // loop_body
      %s21 = ssub.s32 %s16, 1
      %s22 = ssub.s32 %s16, 2
      %s23 = sadd.s32 %s16, 1
      %s24 = ssub.s32 %s16, %s23
      %p25 = scmp.eq.s32.totalorder %s24, 0
      %s27 = sadd.s32 %s26, 1
      %s28 = scalar_select %p25, %s26, %s27
      %p31 = pneg %p25
      %p32 = scmp.eq.s32.totalorder %s16, 1
      %p33 = por %p31, %p32
      %p34 = scmp.ne.s32.totalorder %s26, %s29
      %p35 = scmp.eq.s32.totalorder %s16, 0
      %p36 = por %p34, %p35
      %p37 = scmp.ne.s32.totalorder %s26, %s29
      %p38 = scmp.eq.s32.totalorder %s21, 1
      %p39 = por %p37, %p38
      %p40 = scmp.ne.s32.totalorder %s29, %s30
      %p41 = scmp.eq.s32.totalorder %s21, 0
      %p42 = por %p40, %p41
      %p43 = scmp.ne.s32.totalorder %s29, %s30
      %p44 = scmp.eq.s32.totalorder %s22, 1
      %p45 = por %p43, %p44
      %p47 = scmp.ne.s32.totalorder %s30, %s46
      %p48 = scmp.eq.s32.totalorder %s22, 0
      %p49 = por %p47, %p48
      %s51 = sadd.s32 %s50, 1
      %p54 = scmp.eq.s32.totalorder %s16, 1
      %p55 = scmp.ne.s32.totalorder %s50, %s52
      %p56 = scmp.eq.s32.totalorder %s16, 0
      %p57 = por %p55, %p56
      %p58 = scmp.ne.s32.totalorder %s50, %s52
      %p59 = scmp.eq.s32.totalorder %s21, 1
      %p60 = por %p58, %p59
      %p61 = scmp.ne.s32.totalorder %s52, %s53
      %p62 = scmp.eq.s32.totalorder %s21, 0
      %p63 = por %p61, %p62
      %p64 = scmp.ne.s32.totalorder %s52, %s53
      %p65 = scmp.eq.s32.totalorder %s22, 1
      %p66 = por %p64, %p65
      %p68 = scmp.ne.s32.totalorder %s53, %s67
      %p69 = scmp.eq.s32.totalorder %s22, 0
      %p70 = por %p68, %p69
      %s72 = sadd.s32 %s71, 1
      %p75 = scmp.eq.s32.totalorder %s16, 1
      %p76 = scmp.ne.s32.totalorder %s71, %s73
      %p77 = scmp.eq.s32.totalorder %s16, 0
      %p78 = por %p76, %p77
      %p79 = scmp.ne.s32.totalorder %s71, %s73
      %p80 = scmp.eq.s32.totalorder %s21, 1
      %p81 = por %p79, %p80
      %p82 = scmp.ne.s32.totalorder %s73, %s74
      %p83 = scmp.eq.s32.totalorder %s21, 0
      %p84 = por %p82, %p83
      %p85 = scmp.ne.s32.totalorder %s73, %s74
      %p86 = scmp.eq.s32.totalorder %s22, 1
      %p87 = por %p85, %p86
      %p89 = scmp.ne.s32.totalorder %s74, %s88
      %p90 = scmp.eq.s32.totalorder %s22, 0
      %p91 = por %p89, %p90
      %s93 = sadd.s32 %s92, 1
      %p96 = scmp.eq.s32.totalorder %s16, 1
      %p97 = scmp.ne.s32.totalorder %s92, %s94
      %p98 = scmp.eq.s32.totalorder %s16, 0
      %p99 = por %p97, %p98
      %p100 = scmp.ne.s32.totalorder %s92, %s94
      %p101 = scmp.eq.s32.totalorder %s21, 1
      %p102 = por %p100, %p101
      %p103 = scmp.ne.s32.totalorder %s94, %s95
      %p104 = scmp.eq.s32.totalorder %s21, 0
      %p105 = por %p103, %p104
      %p106 = scmp.ne.s32.totalorder %s94, %s95
      %p107 = scmp.eq.s32.totalorder %s22, 1
      %p108 = por %p106, %p107
      %p110 = scmp.ne.s32.totalorder %s95, %s109
      %p111 = scmp.eq.s32.totalorder %s22, 0
      %p112 = por %p110, %p111
      %s114 = sadd.s32 %s113, 1
      %p117 = scmp.eq.s32.totalorder %s16, 1
      %p118 = scmp.ne.s32.totalorder %s113, %s115
      %p119 = scmp.eq.s32.totalorder %s16, 0
      %p120 = por %p118, %p119
      %p121 = scmp.ne.s32.totalorder %s113, %s115
      %p122 = scmp.eq.s32.totalorder %s21, 1
      %p123 = por %p121, %p122
      %p124 = scmp.ne.s32.totalorder %s115, %s116
      %p125 = scmp.eq.s32.totalorder %s21, 0
      %p126 = por %p124, %p125
      %p127 = scmp.ne.s32.totalorder %s115, %s116
      %p128 = scmp.eq.s32.totalorder %s22, 1
      %p129 = por %p127, %p128
      %p131 = scmp.ne.s32.totalorder %s116, %s130
      %p132 = scmp.eq.s32.totalorder %s22, 0
      %p133 = por %p131, %p132
      %s135 = sadd.s32 %s134, 1
      %p138 = scmp.eq.s32.totalorder %s16, 1
      %p139 = scmp.ne.s32.totalorder %s134, %s136
      %p140 = scmp.eq.s32.totalorder %s16, 0
      %p141 = por %p139, %p140
      %p142 = scmp.ne.s32.totalorder %s134, %s136
      %p143 = scmp.eq.s32.totalorder %s21, 1
      %p144 = por %p142, %p143
      %p145 = scmp.ne.s32.totalorder %s136, %s137
      %p146 = scmp.eq.s32.totalorder %s21, 0
      %p147 = por %p145, %p146
      %p148 = scmp.ne.s32.totalorder %s136, %s137
      %p149 = scmp.eq.s32.totalorder %s22, 1
      %p150 = por %p148, %p149
      %p152 = scmp.ne.s32.totalorder %s137, %s151
      %p153 = scmp.eq.s32.totalorder %s22, 0
      %p154 = por %p152, %p153
      %s156 = sadd.s32 %s155, 1
      %p159 = scmp.eq.s32.totalorder %s16, 1
      %p160 = scmp.ne.s32.totalorder %s155, %s157
      %p161 = scmp.eq.s32.totalorder %s16, 0
      %p162 = por %p160, %p161
      %p163 = scmp.ne.s32.totalorder %s155, %s157
      %p164 = scmp.eq.s32.totalorder %s21, 1
      %p165 = por %p163, %p164
      %p166 = scmp.ne.s32.totalorder %s157, %s158
      %p167 = scmp.eq.s32.totalorder %s21, 0
      %p168 = por %p166, %p167
      %p169 = scmp.ne.s32.totalorder %s157, %s158
      %p170 = scmp.eq.s32.totalorder %s22, 1
      %p171 = por %p169, %p170
      %p173 = scmp.ne.s32.totalorder %s158, %s172
      %p174 = scmp.eq.s32.totalorder %s22, 0
      %p175 = por %p173, %p174
      %s177 = sadd.s32 %s176, 1
      %p180 = scmp.eq.s32.totalorder %s16, 1
      %p181 = scmp.ne.s32.totalorder %s176, %s178
      %p182 = scmp.eq.s32.totalorder %s16, 0
      %p183 = por %p181, %p182
      %p184 = scmp.ne.s32.totalorder %s176, %s178
      %p185 = scmp.eq.s32.totalorder %s21, 1
      %p186 = por %p184, %p185
      %p187 = scmp.ne.s32.totalorder %s178, %s179
      %p188 = scmp.eq.s32.totalorder %s21, 0
      %p189 = por %p187, %p188
      %p190 = scmp.ne.s32.totalorder %s178, %s179
      %p191 = scmp.eq.s32.totalorder %s22, 1
      %p192 = por %p190, %p191
      %p194 = scmp.ne.s32.totalorder %s179, %s193
      %p195 = scmp.eq.s32.totalorder %s22, 0
      %p196 = por %p194, %p195
      %s197 = ssub.s32 %s16, %s23
      %p198 = scmp.eq.s32.totalorder %s197, 0
      %s200 = sadd.s32 %s199, 1
      %s201 = scalar_select %p198, %s199, %s200
      %p204 = pneg %p198
      %p205 = scmp.eq.s32.totalorder %s16, 1
      %p206 = por %p204, %p205
      %p207 = scmp.ne.s32.totalorder %s199, %s202
      %p208 = scmp.eq.s32.totalorder %s16, 0
      %p209 = por %p207, %p208
      %p210 = scmp.ne.s32.totalorder %s199, %s202
      %p211 = scmp.eq.s32.totalorder %s21, 1
      %p212 = por %p210, %p211
      %p213 = scmp.ne.s32.totalorder %s202, %s203
      %p214 = scmp.eq.s32.totalorder %s21, 0
      %p215 = por %p213, %p214
      %p216 = scmp.ne.s32.totalorder %s202, %s203
      %p217 = scmp.eq.s32.totalorder %s22, 1
      %p218 = por %p216, %p217
      %p220 = scmp.ne.s32.totalorder %s203, %s219
      %p221 = scmp.eq.s32.totalorder %s22, 0
      %p222 = por %p220, %p221
      %p223 = scmp.le.s32.totalorder 1, %s16
      %p224 = scmp.lt.s32.totalorder %s16, 3
      %p225 = pnand %p223, %p224
      %p226 = pneg %p225
      // Predicated region
      $region9: #{simpler_fcn_forward.1} parent=5 // pred_check
        _
      $region10: #{simpler_fcn_forward.1} parent=5 // pred_check_branch
        %228 = sbr.rel (%p225) target = $region12
      $region11: #{simpler_fcn_forward.1} parent=5 // pred_region
        %s229 = ssub.s32 %s16, 1
        // Predicated region
        $region13: #{simpler_fcn_forward.1} parent=11 // pred_check
          %p230 = pneg %p63
        $region14: #{simpler_fcn_forward.1} parent=11 // pred_check_branch
          %232 = sbr.rel (%p230) target = $region16
        $region15: #{simpler_fcn_forward.1} parent=11 // pred_region
          _
        $region16: #{simpler_fcn_forward.1} parent=11 // pred_fallthru
          _
        // Predicated region
        $region17: #{simpler_fcn_forward.1} parent=11 // pred_check
          %p233 = pneg %p84
        $region18: #{simpler_fcn_forward.1} parent=11 // pred_check_branch
          %235 = sbr.rel (%p233) target = $region20
        $region19: #{simpler_fcn_forward.1} parent=11 // pred_region
          _
        $region20: #{simpler_fcn_forward.1} parent=11 // pred_fallthru
          _
        // Predicated region
        $region21: #{simpler_fcn_forward.1} parent=11 // pred_check
          %p236 = pneg %p105
        $region22: #{simpler_fcn_forward.1} parent=11 // pred_check_branch
          %238 = sbr.rel (%p236) target = $region24
        $region23: #{simpler_fcn_forward.1} parent=11 // pred_region
          _
        $region24: #{simpler_fcn_forward.1} parent=11 // pred_fallthru
          _
        // Predicated region
        $region25: #{simpler_fcn_forward.1} parent=11 // pred_check
          %p239 = pneg %p126
        $region26: #{simpler_fcn_forward.1} parent=11 // pred_check_branch
          %241 = sbr.rel (%p239) target = $region28
        $region27: #{simpler_fcn_forward.1} parent=11 // pred_region
          _
        $region28: #{simpler_fcn_forward.1} parent=11 // pred_fallthru
          _
        // Predicated region
        $region29: #{simpler_fcn_forward.1} parent=11 // pred_check
          %p242 = pneg %p147
        $region30: #{simpler_fcn_forward.1} parent=11 // pred_check_branch
          %244 = sbr.rel (%p242) target = $region32
        $region31: #{simpler_fcn_forward.1} parent=11 // pred_region
          _
        $region32: #{simpler_fcn_forward.1} parent=11 // pred_fallthru
          _
        // Predicated region
        $region33: #{simpler_fcn_forward.1} parent=11 // pred_check
          %p245 = pneg %p168
        $region34: #{simpler_fcn_forward.1} parent=11 // pred_check_branch
          %247 = sbr.rel (%p245) target = $region36
        $region35: #{simpler_fcn_forward.1} parent=11 // pred_region
          %s249 = ssub.s32 16, 16
          %250 = vsyncadd [#allocation4], %s249
          %s252 = sshll.u32 %s6, 4
          %s253 = int_to_ptr.vmem [resolvable:$true] %s252
          %255 = dma.vmem_to_smem %s253, 16, [#allocation3], [#allocation4]
        $region36: #{simpler_fcn_forward.1} parent=11 // pred_fallthru
          _
        // Predicated region
        $region37: #{simpler_fcn_forward.1} parent=11 // pred_check
          %p256 = pneg %p189
        $region38: #{simpler_fcn_forward.1} parent=11 // pred_check_branch
          %258 = sbr.rel (%p256) target = $region40
        $region39: #{simpler_fcn_forward.1} parent=11 // pred_region
          _
        $region40: #{simpler_fcn_forward.1} parent=11 // pred_fallthru
          _
      $region12: #{simpler_fcn_forward.1} parent=5 // pred_fallthru
        _
      %p259 = scmp.lt.s32.totalorder %s16, 2
      // Predicated region
      $region41: #{simpler_fcn_forward.1} parent=5 // pred_check
        %p260 = pneg %p259
      $region42: #{simpler_fcn_forward.1} parent=5 // pred_check_branch
        %262 = sbr.rel (%p260) target = $region44
      $region43: #{simpler_fcn_forward.1} parent=5 // pred_region
        // Predicated region
        $region45: #{simpler_fcn_forward.1} parent=43 // pred_check
          %p263 = pneg %p36
        $region46: #{simpler_fcn_forward.1} parent=43 // pred_check_branch
          %265 = sbr.rel (%p263) target = $region48
        $region47: #{simpler_fcn_forward.1} parent=43 // pred_region
          %p266 = scmp.lt.s32.totalorder %s16, 1
          %s267 = scalar_select %p266, %s16, 1
          %s268 = smul.addr %s267, 25
          %s269 = smul.addr %s268, 8
          %s270 = scalar_lea.vmem %s0, %s269
        $region48: #{simpler_fcn_forward.1} parent=43 // pred_fallthru
          _
      $region44: #{simpler_fcn_forward.1} parent=5 // pred_fallthru
        _
      %p271 = scmp.le.s32.totalorder 1, %s16
      %p272 = scmp.lt.s32.totalorder %s16, 3
      %p273 = pnand %p271, %p272
      %p274 = pneg %p273
      // Predicated region
      $region49: #{simpler_fcn_forward.1} parent=5 // pred_check
        _
      $region50: #{simpler_fcn_forward.1} parent=5 // pred_check_branch
        %276 = sbr.rel (%p273) target = $region52
      $region51: #{simpler_fcn_forward.1} parent=5 // pred_region
        %s277 = ssub.s32 %s16, 1
        // Predicated region
        $region53: #{simpler_fcn_forward.1} parent=51 // pred_check
          %p278 = pneg %p168
        $region54: #{simpler_fcn_forward.1} parent=51 // pred_check_branch
          %280 = sbr.rel (%p278) target = $region56
        $region55: #{simpler_fcn_forward.1} parent=51 // pred_region
          %281 = dma.done [#allocation4], 16
        $region56: #{simpler_fcn_forward.1} parent=51 // pred_fallthru
          _
        %282 = sfence
        %p283 = scmp.lt.s32.totalorder %s21, 1
        %s284 = scalar_select %p283, %s21, 1
        %s285 = smul.addr %s284, 25
        %s286 = smul.addr %s285, 8
        %s287 = scalar_lea.vmem %s0, %s286
        %p288 = pneg %p42
        %p289 = pneg %p39
        %p290 = pneg %p63
        %p291 = pneg %p60
        %p292 = pneg %p84
        %p293 = pneg %p81
        %p294 = pneg %p105
        %p295 = pneg %p102
        %p296 = pneg %p126
        %p297 = pneg %p123
        %p298 = pneg %p147
        %p299 = pneg %p144
        %p300 = pneg %p168
        %p301 = pneg %p165
        %p302 = pneg %p189
        %p303 = pneg %p186
        %p304 = pneg %p215
        %p305 = pneg %p212
        %p306 = scmp.lt.s32.totalorder %s21, 1
        %s307 = scalar_select %p306, %s21, 1
        %s308 = smul.addr %s307, 2
        %s309 = scalar_lea.vmem %s8, %s308
        %p310 = scmp.lt.s32.totalorder %s21, 1
        %s311 = scalar_select %p310, %s21, 1
        %s312 = smul.addr %s311, 25
        %s313 = smul.addr %s312, 8
        %s314 = scalar_lea.vmem %s0, %s313
        %p315 = scmp.lt.s32.totalorder %s21, 1
        %s316 = scalar_select %p315, %s21, 1
        %s317 = smul.addr %s316, 2
        %s318 = scalar_lea.vmem %s8, %s317
        %v319 = vld [vmem:[%s314] sm:$0xff]
        %v320 = vld [vmem:[%s314 + $0x8] sm:$0xff]
        %v321 = vld [vmem:[%s314 + $0x10] sm:$0xff]
        %v322 = vld [vmem:[%s314 + $0x18] sm:$0xff]
        %v323 = vld [vmem:[%s314 + $0x20] sm:$0xff]
        %v324 = vld [vmem:[%s314 + $0x28] sm:$0xff]
        %v325 = vld [vmem:[%s314 + $0x30] sm:$0xff]
        %v326 = vld [vmem:[%s314 + $0x38] sm:$0xff]
        %v327 = vld [vmem:[%s314 + $0x40] sm:$0xff]
        %v328 = vld [vmem:[%s314 + $0x48] sm:$0xff]
        %v329 = vld [vmem:[%s314 + $0x50] sm:$0xff]
        %v330 = vld [vmem:[%s314 + $0x58] sm:$0xff]
        %v331 = vld [vmem:[%s314 + $0x60] sm:$0xff]
        %v332 = vld [vmem:[%s314 + $0x68] sm:$0xff]
        %v333 = vld [vmem:[%s314 + $0x70] sm:$0xff]
        %v334 = vld [vmem:[%s314 + $0x78] sm:$0xff]
        %v335 = vld [vmem:[%s314 + $0x80] sm:$0xff]
        %v336 = vld [vmem:[%s314 + $0x88] sm:$0xff]
        %v337 = vld [vmem:[%s314 + $0x90] sm:$0xff]
        %v338 = vld [vmem:[%s314 + $0x98] sm:$0xff]
        %v339 = vld [vmem:[%s314 + $0xa0] sm:$0xff]
        %v340 = vld [vmem:[%s314 + $0xa8] sm:$0xff]
        %v341 = vld [vmem:[%s314 + $0xb0] sm:$0xff]
        %v342 = vld [vmem:[%s314 + $0xb8] sm:$0xff]
        %v343 = vld [vmem:[%s314 + $0xc0] sm:$0xf]
        %v344 = vld [vmem:[%s1] sm:$0xff]
        %v345 = vld [vmem:[%s1 + $0x8] sm:$0xff]
        %v346 = vld [vmem:[%s1 + $0x10] sm:$0xff]
        %v347 = vld [vmem:[%s1 + $0x18] sm:$0xff]
        %v348 = vld [vmem:[%s2] sm:$0xff]
        %v349 = vld [vmem:[%s2 + $0x8] sm:$0xff]
        %351 = vset.pattern.permute.xlu0 0
        %352 = vperm.xlu0 %351, %v348
        %v353 = vpop.permute.xlu0 %352
        %356 = vset.pattern.permute.xlu0 0
        %357 = vperm.xlu0 %356, %v349
        %v358 = vpop.permute.xlu0 %357
        %vm360 = vcmask 556032
        %v362 = vsel %vm360, %v345, 0
        %v365 = vsel %vm360, %v347, 0
        %vm367 = vcmask 1043456
        %v369 = vsel %vm367, %v343, 0
        %371 = vmatprep.subr.mxu0 0.0
        %v372 = vand.u32 %v319, 4294901760
        %373 = vmatpush1.msra.mxu0 %v372
        %374 = vmatprep.subr.mxu0 0.0
        %v375 = vand.u32 %v320, 4294901760
        %376 = vmatpush1.msra.mxu0 %v375
        %377 = vmatprep.subr.mxu0 0.0
        %v378 = vand.u32 %v321, 4294901760
        %379 = vmatpush1.msra.mxu0 %v378
        %380 = vmatprep.subr.mxu0 0.0
        %v381 = vand.u32 %v322, 4294901760
        %382 = vmatpush1.msra.mxu0 %v381
        %383 = vmatprep.subr.mxu0 0.0
        %v384 = vand.u32 %v323, 4294901760
        %385 = vmatpush1.msra.mxu0 %v384
        %386 = vmatprep.subr.mxu0 0.0
        %v387 = vand.u32 %v324, 4294901760
        %388 = vmatpush1.msra.mxu0 %v387
        %389 = vmatprep.subr.mxu0 0.0
        %v390 = vand.u32 %v325, 4294901760
        %391 = vmatpush1.msra.mxu0 %v390
        %392 = vmatprep.subr.mxu0 0.0
        %v393 = vand.u32 %v326, 4294901760
        %394 = vmatpush1.msra.mxu0 %v393
        %395 = vmatprep.subr.mxu0 0.0
        %v396 = vand.u32 %v327, 4294901760
        %397 = vmatpush1.msra.mxu0 %v396
        %398 = vmatprep.subr.mxu0 0.0
        %v399 = vand.u32 %v328, 4294901760
        %400 = vmatpush1.msra.mxu0 %v399
        %401 = vmatprep.subr.mxu0 0.0
        %v402 = vand.u32 %v329, 4294901760
        %403 = vmatpush1.msra.mxu0 %v402
        %404 = vmatprep.subr.mxu0 0.0
        %v405 = vand.u32 %v330, 4294901760
        %406 = vmatpush1.msra.mxu0 %v405
        %407 = vmatprep.subr.mxu0 0.0
        %v408 = vand.u32 %v331, 4294901760
        %409 = vmatpush1.msra.mxu0 %v408
        %410 = vmatprep.subr.mxu0 0.0
        %v411 = vand.u32 %v332, 4294901760
        %412 = vmatpush1.msra.mxu0 %v411
        %413 = vmatprep.subr.mxu0 0.0
        %v414 = vand.u32 %v333, 4294901760
        %415 = vmatpush1.msra.mxu0 %v414
        %416 = vmatprep.subr.mxu0 0.0
        %v417 = vand.u32 %v334, 4294901760
        %418 = vmatpush1.msra.mxu0 %v417
        %419 = vmatprep.subr.mxu0 0.0
        %v420 = vand.u32 %v335, 4294901760
        %421 = vmatpush1.msra.mxu0 %v420
        %422 = vmatprep.subr.mxu0 0.0
        %v423 = vand.u32 %v336, 4294901760
        %424 = vmatpush1.msra.mxu0 %v423
        %425 = vmatprep.subr.mxu0 0.0
        %v426 = vand.u32 %v337, 4294901760
        %427 = vmatpush1.msra.mxu0 %v426
        %428 = vmatprep.subr.mxu0 0.0
        %v429 = vand.u32 %v338, 4294901760
        %430 = vmatpush1.msra.mxu0 %v429
        %431 = vmatprep.subr.mxu0 0.0
        %v432 = vand.u32 %v339, 4294901760
        %433 = vmatpush1.msra.mxu0 %v432
        %434 = vmatprep.subr.mxu0 0.0
        %v435 = vand.u32 %v340, 4294901760
        %436 = vmatpush1.msra.mxu0 %v435
        %437 = vmatprep.subr.mxu0 0.0
        %v438 = vand.u32 %v341, 4294901760
        %439 = vmatpush1.msra.mxu0 %v438
        %440 = vmatprep.subr.mxu0 0.0
        %v441 = vand.u32 %v342, 4294901760
        %442 = vmatpush1.msra.mxu0 %v441
        %443 = vmatprep.subr.mxu0 0.0
        %v444 = vand.u32 %v369, 4294901760
        %445 = vmatpush1.msra.mxu0 %v444
        %446 = vmatprep.subr.mxu0 0.0
        %447 = vmatpush1.msra.mxu0 0.0
        %448 = vmatprep.subr.mxu0 0.0
        %449 = vmatpush1.msra.mxu0 0.0
        %450 = vmatprep.subr.mxu0 0.0
        %451 = vmatpush1.msra.mxu0 0.0
        %452 = vmatprep.subr.mxu0 0.0
        %453 = vmatpush1.msra.mxu0 0.0
        %454 = vmatprep.subr.mxu0 0.0
        %455 = vmatpush1.msra.mxu0 0.0
        %456 = vmatprep.subr.mxu0 0.0
        %457 = vmatpush1.msra.mxu0 0.0
        %458 = vmatprep.subr.mxu0 0.0
        %459 = vmatpush1.msra.mxu0 0.0
        %v460 = vand.u32 %v362, 4294901760
        %v461 = vsub.f32 %v362, %v460
        %v462 = vand.u32 %v461, 4294901760
        %v463 = vsub.f32 %v461, %v462
        %v464 = vand.u32 %v463, 4294901760
        %465 = vmatprep.mubr.f32.mxu0 %v464
        %v466 = vand.u32 %v344, 4294901760
        %v467 = vsub.f32 %v344, %v466
        %v468 = vand.u32 %v467, 4294901760
        %v469 = vsub.f32 %v467, %v468
        %v470 = vand.u32 %v469, 4294901760
        %471 = vmatmul.mubr.f32.gmra.mrb[0].mxu0 %v470
        %v472 = vpop.f32.mrb[0].mxu0
        %v473 = vadd.f32 %v353, %v472
        %v474 = vpop.f32.mrb[0].mxu0
        %v475 = vand.u32 %v365, 4294901760
        %v476 = vsub.f32 %v365, %v475
        %v477 = vand.u32 %v476, 4294901760
        %v478 = vsub.f32 %v476, %v477
        %v479 = vand.u32 %v478, 4294901760
        %480 = vmatprep.mubr.f32.mxu0 %v479
        %v481 = vand.u32 %v346, 4294901760
        %v482 = vsub.f32 %v346, %v481
        %v483 = vand.u32 %v482, 4294901760
        %v484 = vsub.f32 %v482, %v483
        %v485 = vand.u32 %v484, 4294901760
        %486 = vmatmul.mubr.f32.gmra.mrb[0].mxu0 %v485
        %v487 = vpop.f32.mrb[0].mxu0
        %v488 = vadd.f32 %v358, %v487
        %v489 = vpop.f32.mrb[0].mxu0
        %490 = vdwg.mxu0
        %491 = vmatprep.subr.mxu0 0.0
        %v492 = vand.u32 %v319, 4294901760
        %v493 = vsub.f32 %v319, %v492
        %v494 = vand.u32 %v493, 4294901760
        %v495 = vsub.f32 %v493, %v494
        %v496 = vand.u32 %v495, 4294901760
        %497 = vmatpush1.msra.mxu0 %v496
        %498 = vmatprep.subr.mxu0 0.0
        %v499 = vand.u32 %v320, 4294901760
        %v500 = vsub.f32 %v320, %v499
        %v501 = vand.u32 %v500, 4294901760
        %v502 = vsub.f32 %v500, %v501
        %v503 = vand.u32 %v502, 4294901760
        %504 = vmatpush1.msra.mxu0 %v503
        %505 = vmatprep.subr.mxu0 0.0
        %v506 = vand.u32 %v321, 4294901760
        %v507 = vsub.f32 %v321, %v506
        %v508 = vand.u32 %v507, 4294901760
        %v509 = vsub.f32 %v507, %v508
        %v510 = vand.u32 %v509, 4294901760
        %511 = vmatpush1.msra.mxu0 %v510
        %512 = vmatprep.subr.mxu0 0.0
        %v513 = vand.u32 %v322, 4294901760
        %v514 = vsub.f32 %v322, %v513
        %v515 = vand.u32 %v514, 4294901760
        %v516 = vsub.f32 %v514, %v515
        %v517 = vand.u32 %v516, 4294901760
        %518 = vmatpush1.msra.mxu0 %v517
        %519 = vmatprep.subr.mxu0 0.0
        %v520 = vand.u32 %v323, 4294901760
        %v521 = vsub.f32 %v323, %v520
        %v522 = vand.u32 %v521, 4294901760
        %v523 = vsub.f32 %v521, %v522
        %v524 = vand.u32 %v523, 4294901760
        %525 = vmatpush1.msra.mxu0 %v524
        %526 = vmatprep.subr.mxu0 0.0
        %v527 = vand.u32 %v324, 4294901760
        %v528 = vsub.f32 %v324, %v527
        %v529 = vand.u32 %v528, 4294901760
        %v530 = vsub.f32 %v528, %v529
        %v531 = vand.u32 %v530, 4294901760
        %532 = vmatpush1.msra.mxu0 %v531
        %533 = vmatprep.subr.mxu0 0.0
        %v534 = vand.u32 %v325, 4294901760
        %v535 = vsub.f32 %v325, %v534
        %v536 = vand.u32 %v535, 4294901760
        %v537 = vsub.f32 %v535, %v536
        %v538 = vand.u32 %v537, 4294901760
        %539 = vmatpush1.msra.mxu0 %v538
        %540 = vmatprep.subr.mxu0 0.0
        %v541 = vand.u32 %v326, 4294901760
        %v542 = vsub.f32 %v326, %v541
        %v543 = vand.u32 %v542, 4294901760
        %v544 = vsub.f32 %v542, %v543
        %v545 = vand.u32 %v544, 4294901760
        %546 = vmatpush1.msra.mxu0 %v545
        %547 = vmatprep.subr.mxu0 0.0
        %v548 = vand.u32 %v327, 4294901760
        %v549 = vsub.f32 %v327, %v548
        %v550 = vand.u32 %v549, 4294901760
        %v551 = vsub.f32 %v549, %v550
        %v552 = vand.u32 %v551, 4294901760
        %553 = vmatpush1.msra.mxu0 %v552
        %554 = vmatprep.subr.mxu0 0.0
        %v555 = vand.u32 %v328, 4294901760
        %v556 = vsub.f32 %v328, %v555
        %v557 = vand.u32 %v556, 4294901760
        %v558 = vsub.f32 %v556, %v557
        %v559 = vand.u32 %v558, 4294901760
        %560 = vmatpush1.msra.mxu0 %v559
        %561 = vmatprep.subr.mxu0 0.0
        %v562 = vand.u32 %v329, 4294901760
        %v563 = vsub.f32 %v329, %v562
        %v564 = vand.u32 %v563, 4294901760
        %v565 = vsub.f32 %v563, %v564
        %v566 = vand.u32 %v565, 4294901760
        %567 = vmatpush1.msra.mxu0 %v566
        %568 = vmatprep.subr.mxu0 0.0
        %v569 = vand.u32 %v330, 4294901760
        %v570 = vsub.f32 %v330, %v569
        %v571 = vand.u32 %v570, 4294901760
        %v572 = vsub.f32 %v570, %v571
        %v573 = vand.u32 %v572, 4294901760
        %574 = vmatpush1.msra.mxu0 %v573
        %575 = vmatprep.subr.mxu0 0.0
        %v576 = vand.u32 %v331, 4294901760
        %v577 = vsub.f32 %v331, %v576
        %v578 = vand.u32 %v577, 4294901760
        %v579 = vsub.f32 %v577, %v578
        %v580 = vand.u32 %v579, 4294901760
        %581 = vmatpush1.msra.mxu0 %v580
        %582 = vmatprep.subr.mxu0 0.0
        %v583 = vand.u32 %v332, 4294901760
        %v584 = vsub.f32 %v332, %v583
        %v585 = vand.u32 %v584, 4294901760
        %v586 = vsub.f32 %v584, %v585
        %v587 = vand.u32 %v586, 4294901760
        %588 = vmatpush1.msra.mxu0 %v587
        %589 = vmatprep.subr.mxu0 0.0
        %v590 = vand.u32 %v333, 4294901760
        %v591 = vsub.f32 %v333, %v590
        %v592 = vand.u32 %v591, 4294901760
        %v593 = vsub.f32 %v591, %v592
        %v594 = vand.u32 %v593, 4294901760
        %595 = vmatpush1.msra.mxu0 %v594
        %596 = vmatprep.subr.mxu0 0.0
        %v597 = vand.u32 %v334, 4294901760
        %v598 = vsub.f32 %v334, %v597
        %v599 = vand.u32 %v598, 4294901760
        %v600 = vsub.f32 %v598, %v599
        %v601 = vand.u32 %v600, 4294901760
        %602 = vmatpush1.msra.mxu0 %v601
        %603 = vmatprep.subr.mxu0 0.0
        %v604 = vand.u32 %v335, 4294901760
        %v605 = vsub.f32 %v335, %v604
        %v606 = vand.u32 %v605, 4294901760
        %v607 = vsub.f32 %v605, %v606
        %v608 = vand.u32 %v607, 4294901760
        %609 = vmatpush1.msra.mxu0 %v608
        %610 = vmatprep.subr.mxu0 0.0
        %v611 = vand.u32 %v336, 4294901760
        %v612 = vsub.f32 %v336, %v611
        %v613 = vand.u32 %v612, 4294901760
        %v614 = vsub.f32 %v612, %v613
        %v615 = vand.u32 %v614, 4294901760
        %616 = vmatpush1.msra.mxu0 %v615
        %617 = vmatprep.subr.mxu0 0.0
        %v618 = vand.u32 %v337, 4294901760
        %v619 = vsub.f32 %v337, %v618
        %v620 = vand.u32 %v619, 4294901760
        %v621 = vsub.f32 %v619, %v620
        %v622 = vand.u32 %v621, 4294901760
        %623 = vmatpush1.msra.mxu0 %v622
        %624 = vmatprep.subr.mxu0 0.0
        %v625 = vand.u32 %v338, 4294901760
        %v626 = vsub.f32 %v338, %v625
        %v627 = vand.u32 %v626, 4294901760
        %v628 = vsub.f32 %v626, %v627
        %v629 = vand.u32 %v628, 4294901760
        %630 = vmatpush1.msra.mxu0 %v629
        %631 = vmatprep.subr.mxu0 0.0
        %v632 = vand.u32 %v339, 4294901760
        %v633 = vsub.f32 %v339, %v632
        %v634 = vand.u32 %v633, 4294901760
        %v635 = vsub.f32 %v633, %v634
        %v636 = vand.u32 %v635, 4294901760
        %637 = vmatpush1.msra.mxu0 %v636
        %638 = vmatprep.subr.mxu0 0.0
        %v639 = vand.u32 %v340, 4294901760
        %v640 = vsub.f32 %v340, %v639
        %v641 = vand.u32 %v640, 4294901760
        %v642 = vsub.f32 %v640, %v641
        %v643 = vand.u32 %v642, 4294901760
        %644 = vmatpush1.msra.mxu0 %v643
        %645 = vmatprep.subr.mxu0 0.0
        %v646 = vand.u32 %v341, 4294901760
        %v647 = vsub.f32 %v341, %v646
        %v648 = vand.u32 %v647, 4294901760
        %v649 = vsub.f32 %v647, %v648
        %v650 = vand.u32 %v649, 4294901760
        %651 = vmatpush1.msra.mxu0 %v650
        %652 = vmatprep.subr.mxu0 0.0
        %v653 = vand.u32 %v342, 4294901760
        %v654 = vsub.f32 %v342, %v653
        %v655 = vand.u32 %v654, 4294901760
        %v656 = vsub.f32 %v654, %v655
        %v657 = vand.u32 %v656, 4294901760
        %658 = vmatpush1.msra.mxu0 %v657
        %659 = vmatprep.subr.mxu0 0.0
        %v660 = vand.u32 %v369, 4294901760
        %v661 = vsub.f32 %v369, %v660
        %v662 = vand.u32 %v661, 4294901760
        %v663 = vsub.f32 %v661, %v662
        %v664 = vand.u32 %v663, 4294901760
        %665 = vmatpush1.msra.mxu0 %v664
        %666 = vmatprep.subr.mxu0 0.0
        %667 = vmatpush1.msra.mxu0 0.0
        %668 = vmatprep.subr.mxu0 0.0
        %669 = vmatpush1.msra.mxu0 0.0
        %670 = vmatprep.subr.mxu0 0.0
        %671 = vmatpush1.msra.mxu0 0.0
        %672 = vmatprep.subr.mxu0 0.0
        %673 = vmatpush1.msra.mxu0 0.0
        %674 = vmatprep.subr.mxu0 0.0
        %675 = vmatpush1.msra.mxu0 0.0
        %676 = vmatprep.subr.mxu0 0.0
        %677 = vmatpush1.msra.mxu0 0.0
        %678 = vmatprep.subr.mxu0 0.0
        %679 = vmatpush1.msra.mxu0 0.0
        %v680 = vand.u32 %v362, 4294901760
        %681 = vmatprep.mubr.f32.mxu0 %v680
        %v682 = vand.u32 %v344, 4294901760
        %683 = vmatmul.mubr.f32.gmra.mrb[0].mxu0 %v682
        %v684 = vpop.f32.mrb[0].mxu0
        %v685 = vadd.f32 %v473, %v684
        %v686 = vpop.f32.mrb[0].mxu0
        %v687 = vand.u32 %v365, 4294901760
        %688 = vmatprep.mubr.f32.mxu0 %v687
        %v689 = vand.u32 %v346, 4294901760
        %690 = vmatmul.mubr.f32.gmra.mrb[0].mxu0 %v689
        %v691 = vpop.f32.mrb[0].mxu0
        %v692 = vadd.f32 %v488, %v691
        %v693 = vpop.f32.mrb[0].mxu0
        %694 = vdwg.mxu0
        %695 = vmatprep.subr.mxu0 0.0
        %v696 = vand.u32 %v319, 4294901760
        %v697 = vsub.f32 %v319, %v696
        %698 = vmatpush1.msra.mxu0 %v697
        %699 = vmatprep.subr.mxu0 0.0
        %v700 = vand.u32 %v320, 4294901760
        %v701 = vsub.f32 %v320, %v700
        %702 = vmatpush1.msra.mxu0 %v701
        %703 = vmatprep.subr.mxu0 0.0
        %v704 = vand.u32 %v321, 4294901760
        %v705 = vsub.f32 %v321, %v704
        %706 = vmatpush1.msra.mxu0 %v705
        %707 = vmatprep.subr.mxu0 0.0
        %v708 = vand.u32 %v322, 4294901760
        %v709 = vsub.f32 %v322, %v708
        %710 = vmatpush1.msra.mxu0 %v709
        %711 = vmatprep.subr.mxu0 0.0
        %v712 = vand.u32 %v323, 4294901760
        %v713 = vsub.f32 %v323, %v712
        %714 = vmatpush1.msra.mxu0 %v713
        %715 = vmatprep.subr.mxu0 0.0
        %v716 = vand.u32 %v324, 4294901760
        %v717 = vsub.f32 %v324, %v716
        %718 = vmatpush1.msra.mxu0 %v717
        %719 = vmatprep.subr.mxu0 0.0
        %v720 = vand.u32 %v325, 4294901760
        %v721 = vsub.f32 %v325, %v720
        %722 = vmatpush1.msra.mxu0 %v721
        %723 = vmatprep.subr.mxu0 0.0
        %v724 = vand.u32 %v326, 4294901760
        %v725 = vsub.f32 %v326, %v724
        %726 = vmatpush1.msra.mxu0 %v725
        %727 = vmatprep.subr.mxu0 0.0
        %v728 = vand.u32 %v327, 4294901760
        %v729 = vsub.f32 %v327, %v728
        %730 = vmatpush1.msra.mxu0 %v729
        %731 = vmatprep.subr.mxu0 0.0
        %v732 = vand.u32 %v328, 4294901760
        %v733 = vsub.f32 %v328, %v732
        %734 = vmatpush1.msra.mxu0 %v733
        %735 = vmatprep.subr.mxu0 0.0
        %v736 = vand.u32 %v329, 4294901760
        %v737 = vsub.f32 %v329, %v736
        %738 = vmatpush1.msra.mxu0 %v737
        %739 = vmatprep.subr.mxu0 0.0
        %v740 = vand.u32 %v330, 4294901760
        %v741 = vsub.f32 %v330, %v740
        %742 = vmatpush1.msra.mxu0 %v741
        %743 = vmatprep.subr.mxu0 0.0
        %v744 = vand.u32 %v331, 4294901760
        %v745 = vsub.f32 %v331, %v744
        %746 = vmatpush1.msra.mxu0 %v745
        %747 = vmatprep.subr.mxu0 0.0
        %v748 = vand.u32 %v332, 4294901760
        %v749 = vsub.f32 %v332, %v748
        %750 = vmatpush1.msra.mxu0 %v749
        %751 = vmatprep.subr.mxu0 0.0
        %v752 = vand.u32 %v333, 4294901760
        %v753 = vsub.f32 %v333, %v752
        %754 = vmatpush1.msra.mxu0 %v753
        %755 = vmatprep.subr.mxu0 0.0
        %v756 = vand.u32 %v334, 4294901760
        %v757 = vsub.f32 %v334, %v756
        %758 = vmatpush1.msra.mxu0 %v757
        %759 = vmatprep.subr.mxu0 0.0
        %v760 = vand.u32 %v335, 4294901760
        %v761 = vsub.f32 %v335, %v760
        %762 = vmatpush1.msra.mxu0 %v761
        %763 = vmatprep.subr.mxu0 0.0
        %v764 = vand.u32 %v336, 4294901760
        %v765 = vsub.f32 %v336, %v764
        %766 = vmatpush1.msra.mxu0 %v765
        %767 = vmatprep.subr.mxu0 0.0
        %v768 = vand.u32 %v337, 4294901760
        %v769 = vsub.f32 %v337, %v768
        %770 = vmatpush1.msra.mxu0 %v769
        %771 = vmatprep.subr.mxu0 0.0
        %v772 = vand.u32 %v338, 4294901760
        %v773 = vsub.f32 %v338, %v772
        %774 = vmatpush1.msra.mxu0 %v773
        %775 = vmatprep.subr.mxu0 0.0
        %v776 = vand.u32 %v339, 4294901760
        %v777 = vsub.f32 %v339, %v776
        %778 = vmatpush1.msra.mxu0 %v777
        %779 = vmatprep.subr.mxu0 0.0
        %v780 = vand.u32 %v340, 4294901760
        %v781 = vsub.f32 %v340, %v780
        %782 = vmatpush1.msra.mxu0 %v781
        %783 = vmatprep.subr.mxu0 0.0
        %v784 = vand.u32 %v341, 4294901760
        %v785 = vsub.f32 %v341, %v784
        %786 = vmatpush1.msra.mxu0 %v785
        %787 = vmatprep.subr.mxu0 0.0
        %v788 = vand.u32 %v342, 4294901760
        %v789 = vsub.f32 %v342, %v788
        %790 = vmatpush1.msra.mxu0 %v789
        %791 = vmatprep.subr.mxu0 0.0
        %v792 = vand.u32 %v369, 4294901760
        %v793 = vsub.f32 %v369, %v792
        %794 = vmatpush1.msra.mxu0 %v793
        %795 = vmatprep.subr.mxu0 0.0
        %796 = vmatpush1.msra.mxu0 0.0
        %797 = vmatprep.subr.mxu0 0.0
        %798 = vmatpush1.msra.mxu0 0.0
        %799 = vmatprep.subr.mxu0 0.0
        %800 = vmatpush1.msra.mxu0 0.0
        %801 = vmatprep.subr.mxu0 0.0
        %802 = vmatpush1.msra.mxu0 0.0
        %803 = vmatprep.subr.mxu0 0.0
        %804 = vmatpush1.msra.mxu0 0.0
        %805 = vmatprep.subr.mxu0 0.0
        %806 = vmatpush1.msra.mxu0 0.0
        %807 = vmatprep.subr.mxu0 0.0
        %808 = vmatpush1.msra.mxu0 0.0
        %v809 = vand.u32 %v362, 4294901760
        %v810 = vsub.f32 %v362, %v809
        %811 = vmatprep.mubr.f32.mxu0 %v810
        %v812 = vand.u32 %v344, 4294901760
        %v813 = vsub.f32 %v344, %v812
        %814 = vmatmul.mubr.f32.gmra.mrb[0].mxu0 %v813
        %v815 = vpop.f32.mrb[0].mxu0
        %v816 = vadd.f32 %v685, %v815
        %v817 = vpop.f32.mrb[0].mxu0
        %v818 = vand.u32 %v365, 4294901760
        %v819 = vsub.f32 %v365, %v818
        %820 = vmatprep.mubr.f32.mxu0 %v819
        %v821 = vand.u32 %v346, 4294901760
        %v822 = vsub.f32 %v346, %v821
        %823 = vmatmul.mubr.f32.gmra.mrb[0].mxu0 %v822
        %v824 = vpop.f32.mrb[0].mxu0
        %v825 = vadd.f32 %v692, %v824
        %v826 = vpop.f32.mrb[0].mxu0
        %827 = vdwg.mxu0
        %828 = vmatprep.subr.mxu0 0.0
        %v829 = vand.u32 %v319, 4294901760
        %830 = vmatpush1.msra.mxu0 %v829
        %831 = vmatprep.subr.mxu0 0.0
        %v832 = vand.u32 %v320, 4294901760
        %833 = vmatpush1.msra.mxu0 %v832
        %834 = vmatprep.subr.mxu0 0.0
        %v835 = vand.u32 %v321, 4294901760
        %836 = vmatpush1.msra.mxu0 %v835
        %837 = vmatprep.subr.mxu0 0.0
        %v838 = vand.u32 %v322, 4294901760
        %839 = vmatpush1.msra.mxu0 %v838
        %840 = vmatprep.subr.mxu0 0.0
        %v841 = vand.u32 %v323, 4294901760
        %842 = vmatpush1.msra.mxu0 %v841
        %843 = vmatprep.subr.mxu0 0.0
        %v844 = vand.u32 %v324, 4294901760
        %845 = vmatpush1.msra.mxu0 %v844
        %846 = vmatprep.subr.mxu0 0.0
        %v847 = vand.u32 %v325, 4294901760
        %848 = vmatpush1.msra.mxu0 %v847
        %849 = vmatprep.subr.mxu0 0.0
        %v850 = vand.u32 %v326, 4294901760
        %851 = vmatpush1.msra.mxu0 %v850
        %852 = vmatprep.subr.mxu0 0.0
        %v853 = vand.u32 %v327, 4294901760
        %854 = vmatpush1.msra.mxu0 %v853
        %855 = vmatprep.subr.mxu0 0.0
        %v856 = vand.u32 %v328, 4294901760
        %857 = vmatpush1.msra.mxu0 %v856
        %858 = vmatprep.subr.mxu0 0.0
        %v859 = vand.u32 %v329, 4294901760
        %860 = vmatpush1.msra.mxu0 %v859
        %861 = vmatprep.subr.mxu0 0.0
        %v862 = vand.u32 %v330, 4294901760
        %863 = vmatpush1.msra.mxu0 %v862
        %864 = vmatprep.subr.mxu0 0.0
        %v865 = vand.u32 %v331, 4294901760
        %866 = vmatpush1.msra.mxu0 %v865
        %867 = vmatprep.subr.mxu0 0.0
        %v868 = vand.u32 %v332, 4294901760
        %869 = vmatpush1.msra.mxu0 %v868
        %870 = vmatprep.subr.mxu0 0.0
        %v871 = vand.u32 %v333, 4294901760
        %872 = vmatpush1.msra.mxu0 %v871
        %873 = vmatprep.subr.mxu0 0.0
        %v874 = vand.u32 %v334, 4294901760
        %875 = vmatpush1.msra.mxu0 %v874
        %876 = vmatprep.subr.mxu0 0.0
        %v877 = vand.u32 %v335, 4294901760
        %878 = vmatpush1.msra.mxu0 %v877
        %879 = vmatprep.subr.mxu0 0.0
        %v880 = vand.u32 %v336, 4294901760
        %881 = vmatpush1.msra.mxu0 %v880
        %882 = vmatprep.subr.mxu0 0.0
        %v883 = vand.u32 %v337, 4294901760
        %884 = vmatpush1.msra.mxu0 %v883
        %885 = vmatprep.subr.mxu0 0.0
        %v886 = vand.u32 %v338, 4294901760
        %887 = vmatpush1.msra.mxu0 %v886
        %888 = vmatprep.subr.mxu0 0.0
        %v889 = vand.u32 %v339, 4294901760
        %890 = vmatpush1.msra.mxu0 %v889
        %891 = vmatprep.subr.mxu0 0.0
        %v892 = vand.u32 %v340, 4294901760
        %893 = vmatpush1.msra.mxu0 %v892
        %894 = vmatprep.subr.mxu0 0.0
        %v895 = vand.u32 %v341, 4294901760
        %896 = vmatpush1.msra.mxu0 %v895
        %897 = vmatprep.subr.mxu0 0.0
        %v898 = vand.u32 %v342, 4294901760
        %899 = vmatpush1.msra.mxu0 %v898
        %900 = vmatprep.subr.mxu0 0.0
        %v901 = vand.u32 %v369, 4294901760
        %902 = vmatpush1.msra.mxu0 %v901
        %903 = vmatprep.subr.mxu0 0.0
        %904 = vmatpush1.msra.mxu0 0.0
        %905 = vmatprep.subr.mxu0 0.0
        %906 = vmatpush1.msra.mxu0 0.0
        %907 = vmatprep.subr.mxu0 0.0
        %908 = vmatpush1.msra.mxu0 0.0
        %909 = vmatprep.subr.mxu0 0.0
        %910 = vmatpush1.msra.mxu0 0.0
        %911 = vmatprep.subr.mxu0 0.0
        %912 = vmatpush1.msra.mxu0 0.0
        %913 = vmatprep.subr.mxu0 0.0
        %914 = vmatpush1.msra.mxu0 0.0
        %915 = vmatprep.subr.mxu0 0.0
        %916 = vmatpush1.msra.mxu0 0.0
        %v917 = vand.u32 %v362, 4294901760
        %v918 = vsub.f32 %v362, %v917
        %v919 = vand.u32 %v918, 4294901760
        %920 = vmatprep.mubr.f32.mxu0 %v919
        %v921 = vand.u32 %v344, 4294901760
        %v922 = vsub.f32 %v344, %v921
        %v923 = vand.u32 %v922, 4294901760
        %924 = vmatmul.mubr.f32.gmra.mrb[0].mxu0 %v923
        %v925 = vpop.f32.mrb[0].mxu0
        %v926 = vadd.f32 %v816, %v925
        %v927 = vpop.f32.mrb[0].mxu0
        %v928 = vand.u32 %v365, 4294901760
        %v929 = vsub.f32 %v365, %v928
        %v930 = vand.u32 %v929, 4294901760
        %931 = vmatprep.mubr.f32.mxu0 %v930
        %v932 = vand.u32 %v346, 4294901760
        %v933 = vsub.f32 %v346, %v932
        %v934 = vand.u32 %v933, 4294901760
        %935 = vmatmul.mubr.f32.gmra.mrb[0].mxu0 %v934
        %v936 = vpop.f32.mrb[0].mxu0
        %v937 = vadd.f32 %v825, %v936
        %v938 = vpop.f32.mrb[0].mxu0
        %939 = vdwg.mxu0
        %940 = vmatprep.subr.mxu0 0.0
        %v941 = vand.u32 %v319, 4294901760
        %v942 = vsub.f32 %v319, %v941
        %v943 = vand.u32 %v942, 4294901760
        %944 = vmatpush1.msra.mxu0 %v943
        %945 = vmatprep.subr.mxu0 0.0
        %v946 = vand.u32 %v320, 4294901760
        %v947 = vsub.f32 %v320, %v946
        %v948 = vand.u32 %v947, 4294901760
        %949 = vmatpush1.msra.mxu0 %v948
        %950 = vmatprep.subr.mxu0 0.0
        %v951 = vand.u32 %v321, 4294901760
        %v952 = vsub.f32 %v321, %v951
        %v953 = vand.u32 %v952, 4294901760
        %954 = vmatpush1.msra.mxu0 %v953
        %955 = vmatprep.subr.mxu0 0.0
        %v956 = vand.u32 %v322, 4294901760
        %v957 = vsub.f32 %v322, %v956
        %v958 = vand.u32 %v957, 4294901760
        %959 = vmatpush1.msra.mxu0 %v958
        %960 = vmatprep.subr.mxu0 0.0
        %v961 = vand.u32 %v323, 4294901760
        %v962 = vsub.f32 %v323, %v961
        %v963 = vand.u32 %v962, 4294901760
        %964 = vmatpush1.msra.mxu0 %v963
        %965 = vmatprep.subr.mxu0 0.0
        %v966 = vand.u32 %v324, 4294901760
        %v967 = vsub.f32 %v324, %v966
        %v968 = vand.u32 %v967, 4294901760
        %969 = vmatpush1.msra.mxu0 %v968
        %970 = vmatprep.subr.mxu0 0.0
        %v971 = vand.u32 %v325, 4294901760
        %v972 = vsub.f32 %v325, %v971
        %v973 = vand.u32 %v972, 4294901760
        %974 = vmatpush1.msra.mxu0 %v973
        %975 = vmatprep.subr.mxu0 0.0
        %v976 = vand.u32 %v326, 4294901760
        %v977 = vsub.f32 %v326, %v976
        %v978 = vand.u32 %v977, 4294901760
        %979 = vmatpush1.msra.mxu0 %v978
        %980 = vmatprep.subr.mxu0 0.0
        %v981 = vand.u32 %v327, 4294901760
        %v982 = vsub.f32 %v327, %v981
        %v983 = vand.u32 %v982, 4294901760
        %984 = vmatpush1.msra.mxu0 %v983
        %985 = vmatprep.subr.mxu0 0.0
        %v986 = vand.u32 %v328, 4294901760
        %v987 = vsub.f32 %v328, %v986
        %v988 = vand.u32 %v987, 4294901760
        %989 = vmatpush1.msra.mxu0 %v988
        %990 = vmatprep.subr.mxu0 0.0
        %v991 = vand.u32 %v329, 4294901760
        %v992 = vsub.f32 %v329, %v991
        %v993 = vand.u32 %v992, 4294901760
        %994 = vmatpush1.msra.mxu0 %v993
        %995 = vmatprep.subr.mxu0 0.0
        %v996 = vand.u32 %v330, 4294901760
        %v997 = vsub.f32 %v330, %v996
        %v998 = vand.u32 %v997, 4294901760
        %999 = vmatpush1.msra.mxu0 %v998
        %1000 = vmatprep.subr.mxu0 0.0
        %v1001 = vand.u32 %v331, 4294901760
        %v1002 = vsub.f32 %v331, %v1001
        %v1003 = vand.u32 %v1002, 4294901760
        %1004 = vmatpush1.msra.mxu0 %v1003
        %1005 = vmatprep.subr.mxu0 0.0
        %v1006 = vand.u32 %v332, 4294901760
        %v1007 = vsub.f32 %v332, %v1006
        %v1008 = vand.u32 %v1007, 4294901760
        %1009 = vmatpush1.msra.mxu0 %v1008
        %1010 = vmatprep.subr.mxu0 0.0
        %v1011 = vand.u32 %v333, 4294901760
        %v1012 = vsub.f32 %v333, %v1011
        %v1013 = vand.u32 %v1012, 4294901760
        %1014 = vmatpush1.msra.mxu0 %v1013
        %1015 = vmatprep.subr.mxu0 0.0
        %v1016 = vand.u32 %v334, 4294901760
        %v1017 = vsub.f32 %v334, %v1016
        %v1018 = vand.u32 %v1017, 4294901760
        %1019 = vmatpush1.msra.mxu0 %v1018
        %1020 = vmatprep.subr.mxu0 0.0
        %v1021 = vand.u32 %v335, 4294901760
        %v1022 = vsub.f32 %v335, %v1021
        %v1023 = vand.u32 %v1022, 4294901760
        %1024 = vmatpush1.msra.mxu0 %v1023
        %1025 = vmatprep.subr.mxu0 0.0
        %v1026 = vand.u32 %v336, 4294901760
        %v1027 = vsub.f32 %v336, %v1026
        %v1028 = vand.u32 %v1027, 4294901760
        %1029 = vmatpush1.msra.mxu0 %v1028
        %1030 = vmatprep.subr.mxu0 0.0
        %v1031 = vand.u32 %v337, 4294901760
        %v1032 = vsub.f32 %v337, %v1031
        %v1033 = vand.u32 %v1032, 4294901760
        %1034 = vmatpush1.msra.mxu0 %v1033
        %1035 = vmatprep.subr.mxu0 0.0
        %v1036 = vand.u32 %v338, 4294901760
        %v1037 = vsub.f32 %v338, %v1036
        %v1038 = vand.u32 %v1037, 4294901760
        %1039 = vmatpush1.msra.mxu0 %v1038
        %1040 = vmatprep.subr.mxu0 0.0
        %v1041 = vand.u32 %v339, 4294901760
        %v1042 = vsub.f32 %v339, %v1041
        %v1043 = vand.u32 %v1042, 4294901760
        %1044 = vmatpush1.msra.mxu0 %v1043
        %1045 = vmatprep.subr.mxu0 0.0
        %v1046 = vand.u32 %v340, 4294901760
        %v1047 = vsub.f32 %v340, %v1046
        %v1048 = vand.u32 %v1047, 4294901760
        %1049 = vmatpush1.msra.mxu0 %v1048
        %1050 = vmatprep.subr.mxu0 0.0
        %v1051 = vand.u32 %v341, 4294901760
        %v1052 = vsub.f32 %v341, %v1051
        %v1053 = vand.u32 %v1052, 4294901760
        %1054 = vmatpush1.msra.mxu0 %v1053
        %1055 = vmatprep.subr.mxu0 0.0
        %v1056 = vand.u32 %v342, 4294901760
        %v1057 = vsub.f32 %v342, %v1056
        %v1058 = vand.u32 %v1057, 4294901760
        %1059 = vmatpush1.msra.mxu0 %v1058
        %1060 = vmatprep.subr.mxu0 0.0
        %v1061 = vand.u32 %v369, 4294901760
        %v1062 = vsub.f32 %v369, %v1061
        %v1063 = vand.u32 %v1062, 4294901760
        %1064 = vmatpush1.msra.mxu0 %v1063
        %1065 = vmatprep.subr.mxu0 0.0
        %1066 = vmatpush1.msra.mxu0 0.0
        %1067 = vmatprep.subr.mxu0 0.0
        %1068 = vmatpush1.msra.mxu0 0.0
        %1069 = vmatprep.subr.mxu0 0.0
        %1070 = vmatpush1.msra.mxu0 0.0
        %1071 = vmatprep.subr.mxu0 0.0
        %1072 = vmatpush1.msra.mxu0 0.0
        %1073 = vmatprep.subr.mxu0 0.0
        %1074 = vmatpush1.msra.mxu0 0.0
        %1075 = vmatprep.subr.mxu0 0.0
        %1076 = vmatpush1.msra.mxu0 0.0
        %1077 = vmatprep.subr.mxu0 0.0
        %1078 = vmatpush1.msra.mxu0 0.0
        %v1079 = vand.u32 %v362, 4294901760
        %1080 = vmatprep.mubr.f32.mxu0 %v1079
        %v1081 = vand.u32 %v344, 4294901760
        %1082 = vmatmul.mubr.f32.gmra.mrb[0].mxu0 %v1081
        %v1083 = vpop.f32.mrb[0].mxu0
        %v1084 = vadd.f32 %v926, %v1083
        %v1085 = vpop.f32.mrb[0].mxu0
        %v1086 = vand.u32 %v365, 4294901760
        %1087 = vmatprep.mubr.f32.mxu0 %v1086
        %v1088 = vand.u32 %v346, 4294901760
        %1089 = vmatmul.mubr.f32.gmra.mrb[0].mxu0 %v1088
        %v1090 = vpop.f32.mrb[0].mxu0
        %v1091 = vadd.f32 %v937, %v1090
        %v1092 = vpop.f32.mrb[0].mxu0
        %1093 = vdwg.mxu0
        %1094 = vmatprep.subr.mxu0 0.0
        %v1095 = vand.u32 %v319, 4294901760
        %1096 = vmatpush1.msra.mxu0 %v1095
        %1097 = vmatprep.subr.mxu0 0.0
        %v1098 = vand.u32 %v320, 4294901760
        %1099 = vmatpush1.msra.mxu0 %v1098
        %1100 = vmatprep.subr.mxu0 0.0
        %v1101 = vand.u32 %v321, 4294901760
        %1102 = vmatpush1.msra.mxu0 %v1101
        %1103 = vmatprep.subr.mxu0 0.0
        %v1104 = vand.u32 %v322, 4294901760
        %1105 = vmatpush1.msra.mxu0 %v1104
        %1106 = vmatprep.subr.mxu0 0.0
        %v1107 = vand.u32 %v323, 4294901760
        %1108 = vmatpush1.msra.mxu0 %v1107
        %1109 = vmatprep.subr.mxu0 0.0
        %v1110 = vand.u32 %v324, 4294901760
        %1111 = vmatpush1.msra.mxu0 %v1110
        %1112 = vmatprep.subr.mxu0 0.0
        %v1113 = vand.u32 %v325, 4294901760
        %1114 = vmatpush1.msra.mxu0 %v1113
        %1115 = vmatprep.subr.mxu0 0.0
        %v1116 = vand.u32 %v326, 4294901760
        %1117 = vmatpush1.msra.mxu0 %v1116
        %1118 = vmatprep.subr.mxu0 0.0
        %v1119 = vand.u32 %v327, 4294901760
        %1120 = vmatpush1.msra.mxu0 %v1119
        %1121 = vmatprep.subr.mxu0 0.0
        %v1122 = vand.u32 %v328, 4294901760
        %1123 = vmatpush1.msra.mxu0 %v1122
        %1124 = vmatprep.subr.mxu0 0.0
        %v1125 = vand.u32 %v329, 4294901760
        %1126 = vmatpush1.msra.mxu0 %v1125
        %1127 = vmatprep.subr.mxu0 0.0
        %v1128 = vand.u32 %v330, 4294901760
        %1129 = vmatpush1.msra.mxu0 %v1128
        %1130 = vmatprep.subr.mxu0 0.0
        %v1131 = vand.u32 %v331, 4294901760
        %1132 = vmatpush1.msra.mxu0 %v1131
        %1133 = vmatprep.subr.mxu0 0.0
        %v1134 = vand.u32 %v332, 4294901760
        %1135 = vmatpush1.msra.mxu0 %v1134
        %1136 = vmatprep.subr.mxu0 0.0
        %v1137 = vand.u32 %v333, 4294901760
        %1138 = vmatpush1.msra.mxu0 %v1137
        %1139 = vmatprep.subr.mxu0 0.0
        %v1140 = vand.u32 %v334, 4294901760
        %1141 = vmatpush1.msra.mxu0 %v1140
        %1142 = vmatprep.subr.mxu0 0.0
        %v1143 = vand.u32 %v335, 4294901760
        %1144 = vmatpush1.msra.mxu0 %v1143
        %1145 = vmatprep.subr.mxu0 0.0
        %v1146 = vand.u32 %v336, 4294901760
        %1147 = vmatpush1.msra.mxu0 %v1146
        %1148 = vmatprep.subr.mxu0 0.0
        %v1149 = vand.u32 %v337, 4294901760
        %1150 = vmatpush1.msra.mxu0 %v1149
        %1151 = vmatprep.subr.mxu0 0.0
        %v1152 = vand.u32 %v338, 4294901760
        %1153 = vmatpush1.msra.mxu0 %v1152
        %1154 = vmatprep.subr.mxu0 0.0
        %v1155 = vand.u32 %v339, 4294901760
        %1156 = vmatpush1.msra.mxu0 %v1155
        %1157 = vmatprep.subr.mxu0 0.0
        %v1158 = vand.u32 %v340, 4294901760
        %1159 = vmatpush1.msra.mxu0 %v1158
        %1160 = vmatprep.subr.mxu0 0.0
        %v1161 = vand.u32 %v341, 4294901760
        %1162 = vmatpush1.msra.mxu0 %v1161
        %1163 = vmatprep.subr.mxu0 0.0
        %v1164 = vand.u32 %v342, 4294901760
        %1165 = vmatpush1.msra.mxu0 %v1164
        %1166 = vmatprep.subr.mxu0 0.0
        %v1167 = vand.u32 %v369, 4294901760
        %1168 = vmatpush1.msra.mxu0 %v1167
        %1169 = vmatprep.subr.mxu0 0.0
        %1170 = vmatpush1.msra.mxu0 0.0
        %1171 = vmatprep.subr.mxu0 0.0
        %1172 = vmatpush1.msra.mxu0 0.0
        %1173 = vmatprep.subr.mxu0 0.0
        %1174 = vmatpush1.msra.mxu0 0.0
        %1175 = vmatprep.subr.mxu0 0.0
        %1176 = vmatpush1.msra.mxu0 0.0
        %1177 = vmatprep.subr.mxu0 0.0
        %1178 = vmatpush1.msra.mxu0 0.0
        %1179 = vmatprep.subr.mxu0 0.0
        %1180 = vmatpush1.msra.mxu0 0.0
        %1181 = vmatprep.subr.mxu0 0.0
        %1182 = vmatpush1.msra.mxu0 0.0
        %v1183 = vand.u32 %v362, 4294901760
        %1184 = vmatprep.mubr.f32.mxu0 %v1183
        %v1185 = vand.u32 %v344, 4294901760
        %1186 = vmatmul.mubr.f32.gmra.mrb[0].mxu0 %v1185
        %v1187 = vpop.f32.mrb[0].mxu0
        %v1188 = vadd.f32 %v1084, %v1187
        %v1189 = vpop.f32.mrb[0].mxu0
        %v1190 = vand.u32 %v365, 4294901760
        %1191 = vmatprep.mubr.f32.mxu0 %v1190
        %v1192 = vand.u32 %v346, 4294901760
        %1193 = vmatmul.mubr.f32.gmra.mrb[0].mxu0 %v1192
        %v1194 = vpop.f32.mrb[0].mxu0
        %v1195 = vadd.f32 %v1091, %v1194
        %v1196 = vpop.f32.mrb[0].mxu0
        %1197 = vdwg.mxu0
        %v1198 = vmax.f32 %v1188, 0.0
        %v1199 = vmax.f32 %v1195, 0.0
        %v1200 = vld [vmem:[%s3] sm:$0xff]
        %v1201 = vld [vmem:[%s3 + $0x8] sm:$0xff]
        %v1202 = vld [vmem:[%s4] sm:$0xff]
        %v1203 = vld [vmem:[%s4 + $0x8] sm:$0xff]
        %1205 = vset.pattern.permute.xlu0 0
        %1206 = vperm.xlu0 %1205, %v1202
        %v1207 = vpop.permute.xlu0 %1206
        %1210 = vset.pattern.permute.xlu0 0
        %1211 = vperm.xlu0 %1210, %v1203
        %v1212 = vpop.permute.xlu0 %1211
        %vm1214 = vcmask 130048
        %v1216 = vsel %vm1214, %v1200, 0
        %v1219 = vsel %vm1214, %v1201, 0
        %1221 = vmatprep.subr.mxu0 0.0
        %v1222 = vand.u32 %v1198, 4294901760
        %1223 = vmatpush1.msra.mxu0 %v1222
        %1224 = vmatprep.subr.mxu0 0.0
        %v1225 = vand.u32 %v1199, 4294901760
        %1226 = vmatpush1.msra.mxu0 %v1225
        %1227 = vmatprep.subr.mxu0 0.0
        %1228 = vmatpush1.msra.mxu0 0.0
        %1229 = vmatprep.subr.mxu0 0.0
        %1230 = vmatpush1.msra.mxu0 0.0
        %1231 = vmatprep.subr.mxu0 0.0
        %1232 = vmatpush1.msra.mxu0 0.0
        %1233 = vmatprep.subr.mxu0 0.0
        %1234 = vmatpush1.msra.mxu0 0.0
        %1235 = vmatprep.subr.mxu0 0.0
        %1236 = vmatpush1.msra.mxu0 0.0
        %1237 = vmatprep.subr.mxu0 0.0
        %1238 = vmatpush1.msra.mxu0 0.0
        %1239 = vmatprep.subr.mxu0 0.0
        %1240 = vmatpush1.msra.mxu0 0.0
        %1241 = vmatprep.subr.mxu0 0.0
        %1242 = vmatpush1.msra.mxu0 0.0
        %1243 = vmatprep.subr.mxu0 0.0
        %1244 = vmatpush1.msra.mxu0 0.0
        %1245 = vmatprep.subr.mxu0 0.0
        %1246 = vmatpush1.msra.mxu0 0.0
        %1247 = vmatprep.subr.mxu0 0.0
        %1248 = vmatpush1.msra.mxu0 0.0
        %1249 = vmatprep.subr.mxu0 0.0
        %1250 = vmatpush1.msra.mxu0 0.0
        %1251 = vmatprep.subr.mxu0 0.0
        %1252 = vmatpush1.msra.mxu0 0.0
        %1253 = vmatprep.subr.mxu0 0.0
        %1254 = vmatpush1.msra.mxu0 0.0
        %1255 = vmatprep.subr.mxu0 0.0
        %1256 = vmatpush1.msra.mxu0 0.0
        %1257 = vmatprep.subr.mxu0 0.0
        %1258 = vmatpush1.msra.mxu0 0.0
        %1259 = vmatprep.subr.mxu0 0.0
        %1260 = vmatpush1.msra.mxu0 0.0
        %1261 = vmatprep.subr.mxu0 0.0
        %1262 = vmatpush1.msra.mxu0 0.0
        %1263 = vmatprep.subr.mxu0 0.0
        %1264 = vmatpush1.msra.mxu0 0.0
        %1265 = vmatprep.subr.mxu0 0.0
        %1266 = vmatpush1.msra.mxu0 0.0
        %1267 = vmatprep.subr.mxu0 0.0
        %1268 = vmatpush1.msra.mxu0 0.0
        %1269 = vmatprep.subr.mxu0 0.0
        %1270 = vmatpush1.msra.mxu0 0.0
        %1271 = vmatprep.subr.mxu0 0.0
        %1272 = vmatpush1.msra.mxu0 0.0
        %1273 = vmatprep.subr.mxu0 0.0
        %1274 = vmatpush1.msra.mxu0 0.0
        %1275 = vmatprep.subr.mxu0 0.0
        %1276 = vmatpush1.msra.mxu0 0.0
        %1277 = vmatprep.subr.mxu0 0.0
        %1278 = vmatpush1.msra.mxu0 0.0
        %1279 = vmatprep.subr.mxu0 0.0
        %1280 = vmatpush1.msra.mxu0 0.0
        %1281 = vmatprep.subr.mxu0 0.0
        %1282 = vmatpush1.msra.mxu0 0.0
        %1283 = vmatprep.subr.mxu0 0.0
        %1284 = vmatpush1.msra.mxu0 0.0
        %1285 = vmatprep.subr.mxu0 0.0
        %1286 = vmatpush1.msra.mxu0 0.0
        %1287 = vmatprep.mubr.f32.mxu0 0.0
        %v1288 = vand.u32 %v1216, 4294901760
        %v1289 = vsub.f32 %v1216, %v1288
        %v1290 = vand.u32 %v1289, 4294901760
        %v1291 = vsub.f32 %v1289, %v1290
        %v1292 = vand.u32 %v1291, 4294901760
        %1293 = vmatmul.mubr.f32.gmra.mrb[0].mxu0 %v1292
        %v1294 = vpop.f32.mrb[0].mxu0
        %v1295 = vadd.f32 %v1207, %v1294
        %v1296 = vpop.f32.mrb[0].mxu0
        %1297 = vmatprep.mubr.f32.mxu0 0.0
        %v1298 = vand.u32 %v1219, 4294901760
        %v1299 = vsub.f32 %v1219, %v1298
        %v1300 = vand.u32 %v1299, 4294901760
        %v1301 = vsub.f32 %v1299, %v1300
        %v1302 = vand.u32 %v1301, 4294901760
        %1303 = vmatmul.mubr.f32.gmra.mrb[0].mxu0 %v1302
        %v1304 = vpop.f32.mrb[0].mxu0
        %v1305 = vadd.f32 %v1212, %v1304
        %v1306 = vpop.f32.mrb[0].mxu0
        %1307 = vdwg.mxu0
        %1308 = vmatprep.subr.mxu0 0.0
        %v1309 = vand.u32 %v1198, 4294901760
        %v1310 = vsub.f32 %v1198, %v1309
        %v1311 = vand.u32 %v1310, 4294901760
        %v1312 = vsub.f32 %v1310, %v1311
        %v1313 = vand.u32 %v1312, 4294901760
        %1314 = vmatpush1.msra.mxu0 %v1313
        %1315 = vmatprep.subr.mxu0 0.0
        %v1316 = vand.u32 %v1199, 4294901760
        %v1317 = vsub.f32 %v1199, %v1316
        %v1318 = vand.u32 %v1317, 4294901760
        %v1319 = vsub.f32 %v1317, %v1318
        %v1320 = vand.u32 %v1319, 4294901760
        %1321 = vmatpush1.msra.mxu0 %v1320
        %1322 = vmatprep.subr.mxu0 0.0
        %1323 = vmatpush1.msra.mxu0 0.0
        %1324 = vmatprep.subr.mxu0 0.0
        %1325 = vmatpush1.msra.mxu0 0.0
        %1326 = vmatprep.subr.mxu0 0.0
        %1327 = vmatpush1.msra.mxu0 0.0
        %1328 = vmatprep.subr.mxu0 0.0
        %1329 = vmatpush1.msra.mxu0 0.0
        %1330 = vmatprep.subr.mxu0 0.0
        %1331 = vmatpush1.msra.mxu0 0.0
        %1332 = vmatprep.subr.mxu0 0.0
        %1333 = vmatpush1.msra.mxu0 0.0
        %1334 = vmatprep.subr.mxu0 0.0
        %1335 = vmatpush1.msra.mxu0 0.0
        %1336 = vmatprep.subr.mxu0 0.0
        %1337 = vmatpush1.msra.mxu0 0.0
        %1338 = vmatprep.subr.mxu0 0.0
        %1339 = vmatpush1.msra.mxu0 0.0
        %1340 = vmatprep.subr.mxu0 0.0
        %1341 = vmatpush1.msra.mxu0 0.0
        %1342 = vmatprep.subr.mxu0 0.0
        %1343 = vmatpush1.msra.mxu0 0.0
        %1344 = vmatprep.subr.mxu0 0.0
        %1345 = vmatpush1.msra.mxu0 0.0
        %1346 = vmatprep.subr.mxu0 0.0
        %1347 = vmatpush1.msra.mxu0 0.0
        %1348 = vmatprep.subr.mxu0 0.0
        %1349 = vmatpush1.msra.mxu0 0.0
        %1350 = vmatprep.subr.mxu0 0.0
        %1351 = vmatpush1.msra.mxu0 0.0
        %1352 = vmatprep.subr.mxu0 0.0
        %1353 = vmatpush1.msra.mxu0 0.0
        %1354 = vmatprep.subr.mxu0 0.0
        %1355 = vmatpush1.msra.mxu0 0.0
        %1356 = vmatprep.subr.mxu0 0.0
        %1357 = vmatpush1.msra.mxu0 0.0
        %1358 = vmatprep.subr.mxu0 0.0
        %1359 = vmatpush1.msra.mxu0 0.0
        %1360 = vmatprep.subr.mxu0 0.0
        %1361 = vmatpush1.msra.mxu0 0.0
        %1362 = vmatprep.subr.mxu0 0.0
        %1363 = vmatpush1.msra.mxu0 0.0
        %1364 = vmatprep.subr.mxu0 0.0
        %1365 = vmatpush1.msra.mxu0 0.0
        %1366 = vmatprep.subr.mxu0 0.0
        %1367 = vmatpush1.msra.mxu0 0.0
        %1368 = vmatprep.subr.mxu0 0.0
        %1369 = vmatpush1.msra.mxu0 0.0
        %1370 = vmatprep.subr.mxu0 0.0
        %1371 = vmatpush1.msra.mxu0 0.0
        %1372 = vmatprep.subr.mxu0 0.0
        %1373 = vmatpush1.msra.mxu0 0.0
        %1374 = vmatprep.subr.mxu0 0.0
        %1375 = vmatpush1.msra.mxu0 0.0
        %1376 = vmatprep.subr.mxu0 0.0
        %1377 = vmatpush1.msra.mxu0 0.0
        %1378 = vmatprep.subr.mxu0 0.0
        %1379 = vmatpush1.msra.mxu0 0.0
        %1380 = vmatprep.subr.mxu0 0.0
        %1381 = vmatpush1.msra.mxu0 0.0
        %1382 = vmatprep.mubr.f32.mxu0 0.0
        %v1383 = vand.u32 %v1216, 4294901760
        %1384 = vmatmul.mubr.f32.gmra.mrb[0].mxu0 %v1383
        %v1385 = vpop.f32.mrb[0].mxu0
        %v1386 = vadd.f32 %v1295, %v1385
        %v1387 = vpop.f32.mrb[0].mxu0
        %1388 = vmatprep.mubr.f32.mxu0 0.0
        %v1389 = vand.u32 %v1219, 4294901760
        %1390 = vmatmul.mubr.f32.gmra.mrb[0].mxu0 %v1389
        %v1391 = vpop.f32.mrb[0].mxu0
        %v1392 = vadd.f32 %v1305, %v1391
        %v1393 = vpop.f32.mrb[0].mxu0
        %1394 = vdwg.mxu0
        %1395 = vmatprep.subr.mxu0 0.0
        %v1396 = vand.u32 %v1198, 4294901760
        %v1397 = vsub.f32 %v1198, %v1396
        %1398 = vmatpush1.msra.mxu0 %v1397
        %1399 = vmatprep.subr.mxu0 0.0
        %v1400 = vand.u32 %v1199, 4294901760
        %v1401 = vsub.f32 %v1199, %v1400
        %1402 = vmatpush1.msra.mxu0 %v1401
        %1403 = vmatprep.subr.mxu0 0.0
        %1404 = vmatpush1.msra.mxu0 0.0
        %1405 = vmatprep.subr.mxu0 0.0
        %1406 = vmatpush1.msra.mxu0 0.0
        %1407 = vmatprep.subr.mxu0 0.0
        %1408 = vmatpush1.msra.mxu0 0.0
        %1409 = vmatprep.subr.mxu0 0.0
        %1410 = vmatpush1.msra.mxu0 0.0
        %1411 = vmatprep.subr.mxu0 0.0
        %1412 = vmatpush1.msra.mxu0 0.0
        %1413 = vmatprep.subr.mxu0 0.0
        %1414 = vmatpush1.msra.mxu0 0.0
        %1415 = vmatprep.subr.mxu0 0.0
        %1416 = vmatpush1.msra.mxu0 0.0
        %1417 = vmatprep.subr.mxu0 0.0
        %1418 = vmatpush1.msra.mxu0 0.0
        %1419 = vmatprep.subr.mxu0 0.0
        %1420 = vmatpush1.msra.mxu0 0.0
        %1421 = vmatprep.subr.mxu0 0.0
        %1422 = vmatpush1.msra.mxu0 0.0
        %1423 = vmatprep.subr.mxu0 0.0
        %1424 = vmatpush1.msra.mxu0 0.0
        %1425 = vmatprep.subr.mxu0 0.0
        %1426 = vmatpush1.msra.mxu0 0.0
        %1427 = vmatprep.subr.mxu0 0.0
        %1428 = vmatpush1.msra.mxu0 0.0
        %1429 = vmatprep.subr.mxu0 0.0
        %1430 = vmatpush1.msra.mxu0 0.0
        %1431 = vmatprep.subr.mxu0 0.0
        %1432 = vmatpush1.msra.mxu0 0.0
        %1433 = vmatprep.subr.mxu0 0.0
        %1434 = vmatpush1.msra.mxu0 0.0
        %1435 = vmatprep.subr.mxu0 0.0
        %1436 = vmatpush1.msra.mxu0 0.0
        %1437 = vmatprep.subr.mxu0 0.0
        %1438 = vmatpush1.msra.mxu0 0.0
        %1439 = vmatprep.subr.mxu0 0.0
        %1440 = vmatpush1.msra.mxu0 0.0
        %1441 = vmatprep.subr.mxu0 0.0
        %1442 = vmatpush1.msra.mxu0 0.0
        %1443 = vmatprep.subr.mxu0 0.0
        %1444 = vmatpush1.msra.mxu0 0.0
        %1445 = vmatprep.subr.mxu0 0.0
        %1446 = vmatpush1.msra.mxu0 0.0
        %1447 = vmatprep.subr.mxu0 0.0
        %1448 = vmatpush1.msra.mxu0 0.0
        %1449 = vmatprep.subr.mxu0 0.0
        %1450 = vmatpush1.msra.mxu0 0.0
        %1451 = vmatprep.subr.mxu0 0.0
        %1452 = vmatpush1.msra.mxu0 0.0
        %1453 = vmatprep.subr.mxu0 0.0
        %1454 = vmatpush1.msra.mxu0 0.0
        %1455 = vmatprep.subr.mxu0 0.0
        %1456 = vmatpush1.msra.mxu0 0.0
        %1457 = vmatprep.subr.mxu0 0.0
        %1458 = vmatpush1.msra.mxu0 0.0
        %1459 = vmatprep.subr.mxu0 0.0
        %1460 = vmatpush1.msra.mxu0 0.0
        %1461 = vmatprep.subr.mxu0 0.0
        %1462 = vmatpush1.msra.mxu0 0.0
        %1463 = vmatprep.mubr.f32.mxu0 0.0
        %v1464 = vand.u32 %v1216, 4294901760
        %v1465 = vsub.f32 %v1216, %v1464
        %1466 = vmatmul.mubr.f32.gmra.mrb[0].mxu0 %v1465
        %v1467 = vpop.f32.mrb[0].mxu0
        %v1468 = vadd.f32 %v1386, %v1467
        %v1469 = vpop.f32.mrb[0].mxu0
        %1470 = vmatprep.mubr.f32.mxu0 0.0
        %v1471 = vand.u32 %v1219, 4294901760
        %v1472 = vsub.f32 %v1219, %v1471
        %1473 = vmatmul.mubr.f32.gmra.mrb[0].mxu0 %v1472
        %v1474 = vpop.f32.mrb[0].mxu0
        %v1475 = vadd.f32 %v1392, %v1474
        %v1476 = vpop.f32.mrb[0].mxu0
        %1477 = vdwg.mxu0
        %1478 = vmatprep.subr.mxu0 0.0
        %v1479 = vand.u32 %v1198, 4294901760
        %1480 = vmatpush1.msra.mxu0 %v1479
        %1481 = vmatprep.subr.mxu0 0.0
        %v1482 = vand.u32 %v1199, 4294901760
        %1483 = vmatpush1.msra.mxu0 %v1482
        %1484 = vmatprep.subr.mxu0 0.0
        %1485 = vmatpush1.msra.mxu0 0.0
        %1486 = vmatprep.subr.mxu0 0.0
        %1487 = vmatpush1.msra.mxu0 0.0
        %1488 = vmatprep.subr.mxu0 0.0
        %1489 = vmatpush1.msra.mxu0 0.0
        %1490 = vmatprep.subr.mxu0 0.0
        %1491 = vmatpush1.msra.mxu0 0.0
        %1492 = vmatprep.subr.mxu0 0.0
        %1493 = vmatpush1.msra.mxu0 0.0
        %1494 = vmatprep.subr.mxu0 0.0
        %1495 = vmatpush1.msra.mxu0 0.0
        %1496 = vmatprep.subr.mxu0 0.0
        %1497 = vmatpush1.msra.mxu0 0.0
        %1498 = vmatprep.subr.mxu0 0.0
        %1499 = vmatpush1.msra.mxu0 0.0
        %1500 = vmatprep.subr.mxu0 0.0
        %1501 = vmatpush1.msra.mxu0 0.0
        %1502 = vmatprep.subr.mxu0 0.0
        %1503 = vmatpush1.msra.mxu0 0.0
        %1504 = vmatprep.subr.mxu0 0.0
        %1505 = vmatpush1.msra.mxu0 0.0
        %1506 = vmatprep.subr.mxu0 0.0
        %1507 = vmatpush1.msra.mxu0 0.0
        %1508 = vmatprep.subr.mxu0 0.0
        %1509 = vmatpush1.msra.mxu0 0.0
        %1510 = vmatprep.subr.mxu0 0.0
        %1511 = vmatpush1.msra.mxu0 0.0
        %1512 = vmatprep.subr.mxu0 0.0
        %1513 = vmatpush1.msra.mxu0 0.0
        %1514 = vmatprep.subr.mxu0 0.0
        %1515 = vmatpush1.msra.mxu0 0.0
        %1516 = vmatprep.subr.mxu0 0.0
        %1517 = vmatpush1.msra.mxu0 0.0
        %1518 = vmatprep.subr.mxu0 0.0
        %1519 = vmatpush1.msra.mxu0 0.0
        %1520 = vmatprep.subr.mxu0 0.0
        %1521 = vmatpush1.msra.mxu0 0.0
        %1522 = vmatprep.subr.mxu0 0.0
        %1523 = vmatpush1.msra.mxu0 0.0
        %1524 = vmatprep.subr.mxu0 0.0
        %1525 = vmatpush1.msra.mxu0 0.0
        %1526 = vmatprep.subr.mxu0 0.0
        %1527 = vmatpush1.msra.mxu0 0.0
        %1528 = vmatprep.subr.mxu0 0.0
        %1529 = vmatpush1.msra.mxu0 0.0
        %1530 = vmatprep.subr.mxu0 0.0
        %1531 = vmatpush1.msra.mxu0 0.0
        %1532 = vmatprep.subr.mxu0 0.0
        %1533 = vmatpush1.msra.mxu0 0.0
        %1534 = vmatprep.subr.mxu0 0.0
        %1535 = vmatpush1.msra.mxu0 0.0
        %1536 = vmatprep.subr.mxu0 0.0
        %1537 = vmatpush1.msra.mxu0 0.0
        %1538 = vmatprep.subr.mxu0 0.0
        %1539 = vmatpush1.msra.mxu0 0.0
        %1540 = vmatprep.subr.mxu0 0.0
        %1541 = vmatpush1.msra.mxu0 0.0
        %1542 = vmatprep.subr.mxu0 0.0
        %1543 = vmatpush1.msra.mxu0 0.0
        %1544 = vmatprep.mubr.f32.mxu0 0.0
        %v1545 = vand.u32 %v1216, 4294901760
        %v1546 = vsub.f32 %v1216, %v1545
        %v1547 = vand.u32 %v1546, 4294901760
        %1548 = vmatmul.mubr.f32.gmra.mrb[0].mxu0 %v1547
        %v1549 = vpop.f32.mrb[0].mxu0
        %v1550 = vadd.f32 %v1468, %v1549
        %v1551 = vpop.f32.mrb[0].mxu0
        %1552 = vmatprep.mubr.f32.mxu0 0.0
        %v1553 = vand.u32 %v1219, 4294901760
        %v1554 = vsub.f32 %v1219, %v1553
        %v1555 = vand.u32 %v1554, 4294901760
        %1556 = vmatmul.mubr.f32.gmra.mrb[0].mxu0 %v1555
        %v1557 = vpop.f32.mrb[0].mxu0
        %v1558 = vadd.f32 %v1475, %v1557
        %v1559 = vpop.f32.mrb[0].mxu0
        %1560 = vdwg.mxu0
        %1561 = vmatprep.subr.mxu0 0.0
        %v1562 = vand.u32 %v1198, 4294901760
        %v1563 = vsub.f32 %v1198, %v1562
        %v1564 = vand.u32 %v1563, 4294901760
        %1565 = vmatpush1.msra.mxu0 %v1564
        %1566 = vmatprep.subr.mxu0 0.0
        %v1567 = vand.u32 %v1199, 4294901760
        %v1568 = vsub.f32 %v1199, %v1567
        %v1569 = vand.u32 %v1568, 4294901760
        %1570 = vmatpush1.msra.mxu0 %v1569
        %1571 = vmatprep.subr.mxu0 0.0
        %1572 = vmatpush1.msra.mxu0 0.0
        %1573 = vmatprep.subr.mxu0 0.0
        %1574 = vmatpush1.msra.mxu0 0.0
        %1575 = vmatprep.subr.mxu0 0.0
        %1576 = vmatpush1.msra.mxu0 0.0
        %1577 = vmatprep.subr.mxu0 0.0
        %1578 = vmatpush1.msra.mxu0 0.0
        %1579 = vmatprep.subr.mxu0 0.0
        %1580 = vmatpush1.msra.mxu0 0.0
        %1581 = vmatprep.subr.mxu0 0.0
        %1582 = vmatpush1.msra.mxu0 0.0
        %1583 = vmatprep.subr.mxu0 0.0
        %1584 = vmatpush1.msra.mxu0 0.0
        %1585 = vmatprep.subr.mxu0 0.0
        %1586 = vmatpush1.msra.mxu0 0.0
        %1587 = vmatprep.subr.mxu0 0.0
        %1588 = vmatpush1.msra.mxu0 0.0
        %1589 = vmatprep.subr.mxu0 0.0
        %1590 = vmatpush1.msra.mxu0 0.0
        %1591 = vmatprep.subr.mxu0 0.0
        %1592 = vmatpush1.msra.mxu0 0.0
        %1593 = vmatprep.subr.mxu0 0.0
        %1594 = vmatpush1.msra.mxu0 0.0
        %1595 = vmatprep.subr.mxu0 0.0
        %1596 = vmatpush1.msra.mxu0 0.0
        %1597 = vmatprep.subr.mxu0 0.0
        %1598 = vmatpush1.msra.mxu0 0.0
        %1599 = vmatprep.subr.mxu0 0.0
        %1600 = vmatpush1.msra.mxu0 0.0
        %1601 = vmatprep.subr.mxu0 0.0
        %1602 = vmatpush1.msra.mxu0 0.0
        %1603 = vmatprep.subr.mxu0 0.0
        %1604 = vmatpush1.msra.mxu0 0.0
        %1605 = vmatprep.subr.mxu0 0.0
        %1606 = vmatpush1.msra.mxu0 0.0
        %1607 = vmatprep.subr.mxu0 0.0
        %1608 = vmatpush1.msra.mxu0 0.0
        %1609 = vmatprep.subr.mxu0 0.0
        %1610 = vmatpush1.msra.mxu0 0.0
        %1611 = vmatprep.subr.mxu0 0.0
        %1612 = vmatpush1.msra.mxu0 0.0
        %1613 = vmatprep.subr.mxu0 0.0
        %1614 = vmatpush1.msra.mxu0 0.0
        %1615 = vmatprep.subr.mxu0 0.0
        %1616 = vmatpush1.msra.mxu0 0.0
        %1617 = vmatprep.subr.mxu0 0.0
        %1618 = vmatpush1.msra.mxu0 0.0
        %1619 = vmatprep.subr.mxu0 0.0
        %1620 = vmatpush1.msra.mxu0 0.0
        %1621 = vmatprep.subr.mxu0 0.0
        %1622 = vmatpush1.msra.mxu0 0.0
        %1623 = vmatprep.subr.mxu0 0.0
        %1624 = vmatpush1.msra.mxu0 0.0
        %1625 = vmatprep.subr.mxu0 0.0
        %1626 = vmatpush1.msra.mxu0 0.0
        %1627 = vmatprep.subr.mxu0 0.0
        %1628 = vmatpush1.msra.mxu0 0.0
        %1629 = vmatprep.subr.mxu0 0.0
        %1630 = vmatpush1.msra.mxu0 0.0
        %1631 = vmatprep.mubr.f32.mxu0 0.0
        %v1632 = vand.u32 %v1216, 4294901760
        %1633 = vmatmul.mubr.f32.gmra.mrb[0].mxu0 %v1632
        %v1634 = vpop.f32.mrb[0].mxu0
        %v1635 = vadd.f32 %v1550, %v1634
        %v1636 = vpop.f32.mrb[0].mxu0
        %1637 = vmatprep.mubr.f32.mxu0 0.0
        %v1638 = vand.u32 %v1219, 4294901760
        %1639 = vmatmul.mubr.f32.gmra.mrb[0].mxu0 %v1638
        %v1640 = vpop.f32.mrb[0].mxu0
        %v1641 = vadd.f32 %v1558, %v1640
        %v1642 = vpop.f32.mrb[0].mxu0
        %1643 = vdwg.mxu0
        %1644 = vmatprep.subr.mxu0 0.0
        %v1645 = vand.u32 %v1198, 4294901760
        %1646 = vmatpush1.msra.mxu0 %v1645
        %1647 = vmatprep.subr.mxu0 0.0
        %v1648 = vand.u32 %v1199, 4294901760
        %1649 = vmatpush1.msra.mxu0 %v1648
        %1650 = vmatprep.subr.mxu0 0.0
        %1651 = vmatpush1.msra.mxu0 0.0
        %1652 = vmatprep.subr.mxu0 0.0
        %1653 = vmatpush1.msra.mxu0 0.0
        %1654 = vmatprep.subr.mxu0 0.0
        %1655 = vmatpush1.msra.mxu0 0.0
        %1656 = vmatprep.subr.mxu0 0.0
        %1657 = vmatpush1.msra.mxu0 0.0
        %1658 = vmatprep.subr.mxu0 0.0
        %1659 = vmatpush1.msra.mxu0 0.0
        %1660 = vmatprep.subr.mxu0 0.0
        %1661 = vmatpush1.msra.mxu0 0.0
        %1662 = vmatprep.subr.mxu0 0.0
        %1663 = vmatpush1.msra.mxu0 0.0
        %1664 = vmatprep.subr.mxu0 0.0
        %1665 = vmatpush1.msra.mxu0 0.0
        %1666 = vmatprep.subr.mxu0 0.0
        %1667 = vmatpush1.msra.mxu0 0.0
        %1668 = vmatprep.subr.mxu0 0.0
        %1669 = vmatpush1.msra.mxu0 0.0
        %1670 = vmatprep.subr.mxu0 0.0
        %1671 = vmatpush1.msra.mxu0 0.0
        %1672 = vmatprep.subr.mxu0 0.0
        %1673 = vmatpush1.msra.mxu0 0.0
        %1674 = vmatprep.subr.mxu0 0.0
        %1675 = vmatpush1.msra.mxu0 0.0
        %1676 = vmatprep.subr.mxu0 0.0
        %1677 = vmatpush1.msra.mxu0 0.0
        %1678 = vmatprep.subr.mxu0 0.0
        %1679 = vmatpush1.msra.mxu0 0.0
        %1680 = vmatprep.subr.mxu0 0.0
        %1681 = vmatpush1.msra.mxu0 0.0
        %1682 = vmatprep.subr.mxu0 0.0
        %1683 = vmatpush1.msra.mxu0 0.0
        %1684 = vmatprep.subr.mxu0 0.0
        %1685 = vmatpush1.msra.mxu0 0.0
        %1686 = vmatprep.subr.mxu0 0.0
        %1687 = vmatpush1.msra.mxu0 0.0
        %1688 = vmatprep.subr.mxu0 0.0
        %1689 = vmatpush1.msra.mxu0 0.0
        %1690 = vmatprep.subr.mxu0 0.0
        %1691 = vmatpush1.msra.mxu0 0.0
        %1692 = vmatprep.subr.mxu0 0.0
        %1693 = vmatpush1.msra.mxu0 0.0
        %1694 = vmatprep.subr.mxu0 0.0
        %1695 = vmatpush1.msra.mxu0 0.0
        %1696 = vmatprep.subr.mxu0 0.0
        %1697 = vmatpush1.msra.mxu0 0.0
        %1698 = vmatprep.subr.mxu0 0.0
        %1699 = vmatpush1.msra.mxu0 0.0
        %1700 = vmatprep.subr.mxu0 0.0
        %1701 = vmatpush1.msra.mxu0 0.0
        %1702 = vmatprep.subr.mxu0 0.0
        %1703 = vmatpush1.msra.mxu0 0.0
        %1704 = vmatprep.subr.mxu0 0.0
        %1705 = vmatpush1.msra.mxu0 0.0
        %1706 = vmatprep.subr.mxu0 0.0
        %1707 = vmatpush1.msra.mxu0 0.0
        %1708 = vmatprep.subr.mxu0 0.0
        %1709 = vmatpush1.msra.mxu0 0.0
        %1710 = vmatprep.mubr.f32.mxu0 0.0
        %v1711 = vand.u32 %v1216, 4294901760
        %1712 = vmatmul.mubr.f32.gmra.mrb[0].mxu0 %v1711
        %v1713 = vpop.f32.mrb[0].mxu0
        %v1714 = vadd.f32 %v1635, %v1713
        %v1715 = vpop.f32.mrb[0].mxu0
        %1716 = vmatprep.mubr.f32.mxu0 0.0
        %v1717 = vand.u32 %v1219, 4294901760
        %1718 = vmatmul.mubr.f32.gmra.mrb[0].mxu0 %v1717
        %v1719 = vpop.f32.mrb[0].mxu0
        %v1720 = vadd.f32 %v1641, %v1719
        %v1721 = vpop.f32.mrb[0].mxu0
        %1722 = vdwg.mxu0
        %s1723 = sld [smem:[#allocation3]]
        %v1724 = vstv %s1723
        %v1725 = vmul.f32 %v1724, %v1714
        %s1726 = sld [smem:[#allocation3 + $0x1]]
        %v1727 = vstv %s1726
        %v1728 = vmul.f32 %v1727, %v1714
        %v1730 = vrot.slane %v1728, 1
        %v1732 = vadd.f32 %v1725, %v1730
        %s1733 = sld [smem:[#allocation3 + $0x2]]
        %v1734 = vstv %s1733
        %v1735 = vmul.f32 %v1734, %v1714
        %v1737 = vrot.slane %v1735, 2
        %v1739 = vadd.f32 %v1732, %v1737
        %s1740 = sld [smem:[#allocation3 + $0x3]]
        %v1741 = vstv %s1740
        %v1742 = vmul.f32 %v1741, %v1714
        %v1744 = vrot.slane %v1742, 3
        %v1746 = vadd.f32 %v1739, %v1744
        %s1747 = sld [smem:[#allocation3 + $0x4]]
        %v1748 = vstv %s1747
        %v1749 = vmul.f32 %v1748, %v1714
        %v1751 = vrot.slane %v1749, 4
        %v1753 = vadd.f32 %v1746, %v1751
        %s1754 = sld [smem:[#allocation3 + $0x5]]
        %v1755 = vstv %s1754
        %v1756 = vmul.f32 %v1755, %v1714
        %v1758 = vrot.slane %v1756, 5
        %v1760 = vadd.f32 %v1753, %v1758
        %s1761 = sld [smem:[#allocation3 + $0x6]]
        %v1762 = vstv %s1761
        %v1763 = vmul.f32 %v1762, %v1714
        %v1765 = vrot.slane %v1763, 6
        %v1767 = vadd.f32 %v1760, %v1765
        %s1768 = sld [smem:[#allocation3 + $0x7]]
        %v1769 = vstv %s1768
        %v1770 = vmul.f32 %v1769, %v1714
        %v1772 = vrot.slane %v1770, 7
        %v1774 = vadd.f32 %v1767, %v1772
        %s1775 = sld [smem:[#allocation3 + $0x8]]
        %v1776 = vstv %s1775
        %v1777 = vmul.f32 %v1776, %v1720
        %v1778 = vadd.f32 %v1774, %v1777
        %s1779 = sld [smem:[#allocation3 + $0x9]]
        %v1780 = vstv %s1779
        %v1781 = vmul.f32 %v1780, %v1720
        %v1783 = vrot.slane %v1781, 1
        %v1785 = vadd.f32 %v1778, %v1783
        %s1786 = sld [smem:[#allocation3 + $0xa]]
        %v1787 = vstv %s1786
        %v1788 = vmul.f32 %v1787, %v1720
        %v1790 = vrot.slane %v1788, 2
        %v1792 = vadd.f32 %v1785, %v1790
        %s1793 = sld [smem:[#allocation3 + $0xb]]
        %v1794 = vstv %s1793
        %v1795 = vmul.f32 %v1794, %v1720
        %v1797 = vrot.slane %v1795, 3
        %v1799 = vadd.f32 %v1792, %v1797
        %s1800 = sld [smem:[#allocation3 + $0xc]]
        %v1801 = vstv %s1800
        %v1802 = vmul.f32 %v1801, %v1720
        %v1804 = vrot.slane %v1802, 4
        %v1806 = vadd.f32 %v1799, %v1804
        %s1807 = sld [smem:[#allocation3 + $0xd]]
        %v1808 = vstv %s1807
        %v1809 = vmul.f32 %v1808, %v1720
        %v1811 = vrot.slane %v1809, 5
        %v1813 = vadd.f32 %v1806, %v1811
        %s1814 = sld [smem:[#allocation3 + $0xe]]
        %v1815 = vstv %s1814
        %v1816 = vmul.f32 %v1815, %v1720
        %v1818 = vrot.slane %v1816, 6
        %v1820 = vadd.f32 %v1813, %v1818
        %s1821 = sld [smem:[#allocation3 + $0xf]]
        %v1822 = vstv %s1821
        %v1823 = vmul.f32 %v1822, %v1720
        %v1825 = vrot.slane %v1823, 7
        %v1827 = vadd.f32 %v1820, %v1825
        %v1828 = vld [vmem:[%s5] sm:$0xff]
        %v1829 = vld [vmem:[%s5 + $0x8] sm:$0xff]
        %v1830 = vld [vmem:[%s5 + $0x10] sm:$0xff]
        %v1831 = vld [vmem:[%s5 + $0x18] sm:$0xff]
        %s1832 = sld [smem:[#allocation2]]
        %v1833 = vstv %s1832
        %v1835 = vsel %vm1214, %v1827, 0
        %v1837 = vand.u32 %v1829, 4294901760
        %1838 = vmatprep.subr.mxu0 %v1837
        %v1839 = vand.u32 %v1828, 4294901760
        %1840 = vmatpush1.msra.mxu0 %v1839
        %v1841 = vand.u32 %v1831, 4294901760
        %1842 = vmatprep.subr.mxu0 %v1841
        %v1843 = vand.u32 %v1830, 4294901760
        %1844 = vmatpush1.msra.mxu0 %v1843
        %1845 = vmatprep.subr.mxu0 0.0
        %1846 = vmatpush1.msra.mxu0 0.0
        %1847 = vmatprep.subr.mxu0 0.0
        %1848 = vmatpush1.msra.mxu0 0.0
        %1849 = vmatprep.subr.mxu0 0.0
        %1850 = vmatpush1.msra.mxu0 0.0
        %1851 = vmatprep.subr.mxu0 0.0
        %1852 = vmatpush1.msra.mxu0 0.0
        %1853 = vmatprep.subr.mxu0 0.0
        %1854 = vmatpush1.msra.mxu0 0.0
        %1855 = vmatprep.subr.mxu0 0.0
        %1856 = vmatpush1.msra.mxu0 0.0
        %1857 = vmatprep.subr.mxu0 0.0
        %1858 = vmatpush1.msra.mxu0 0.0
        %1859 = vmatprep.subr.mxu0 0.0
        %1860 = vmatpush1.msra.mxu0 0.0
        %1861 = vmatprep.subr.mxu0 0.0
        %1862 = vmatpush1.msra.mxu0 0.0
        %1863 = vmatprep.subr.mxu0 0.0
        %1864 = vmatpush1.msra.mxu0 0.0
        %1865 = vmatprep.subr.mxu0 0.0
        %1866 = vmatpush1.msra.mxu0 0.0
        %1867 = vmatprep.subr.mxu0 0.0
        %1868 = vmatpush1.msra.mxu0 0.0
        %1869 = vmatprep.subr.mxu0 0.0
        %1870 = vmatpush1.msra.mxu0 0.0
        %1871 = vmatprep.subr.mxu0 0.0
        %1872 = vmatpush1.msra.mxu0 0.0
        %1873 = vmatprep.subr.mxu0 0.0
        %1874 = vmatpush1.msra.mxu0 0.0
        %1875 = vmatprep.subr.mxu0 0.0
        %1876 = vmatpush1.msra.mxu0 0.0
        %1877 = vmatprep.subr.mxu0 0.0
        %1878 = vmatpush1.msra.mxu0 0.0
        %1879 = vmatprep.subr.mxu0 0.0
        %1880 = vmatpush1.msra.mxu0 0.0
        %1881 = vmatprep.subr.mxu0 0.0
        %1882 = vmatpush1.msra.mxu0 0.0
        %1883 = vmatprep.subr.mxu0 0.0
        %1884 = vmatpush1.msra.mxu0 0.0
        %1885 = vmatprep.subr.mxu0 0.0
        %1886 = vmatpush1.msra.mxu0 0.0
        %1887 = vmatprep.subr.mxu0 0.0
        %1888 = vmatpush1.msra.mxu0 0.0
        %1889 = vmatprep.subr.mxu0 0.0
        %1890 = vmatpush1.msra.mxu0 0.0
        %1891 = vmatprep.subr.mxu0 0.0
        %1892 = vmatpush1.msra.mxu0 0.0
        %1893 = vmatprep.subr.mxu0 0.0
        %1894 = vmatpush1.msra.mxu0 0.0
        %1895 = vmatprep.subr.mxu0 0.0
        %1896 = vmatpush1.msra.mxu0 0.0
        %1897 = vmatprep.subr.mxu0 0.0
        %1898 = vmatpush1.msra.mxu0 0.0
        %1899 = vmatprep.subr.mxu0 0.0
        %1900 = vmatpush1.msra.mxu0 0.0
        %1901 = vmatprep.subr.mxu0 0.0
        %1902 = vmatpush1.msra.mxu0 0.0
        %1903 = vmatprep.subr.mxu0 0.0
        %1904 = vmatpush1.msra.mxu0 0.0
        %1905 = vmatprep.mubr.f32.mxu0 0.0
        %v1906 = vand.u32 %v1835, 4294901760
        %v1907 = vsub.f32 %v1835, %v1906
        %v1908 = vand.u32 %v1907, 4294901760
        %v1909 = vsub.f32 %v1907, %v1908
        %v1910 = vand.u32 %v1909, 4294901760
        %1911 = vmatmul.mubr.f32.gmra.mrb[0].mxu0 %v1910
        %v1912 = vpop.f32.mrb[0].mxu0
        %v1913 = vadd.f32 %v1833, %v1912
        %v1914 = vpop.f32.mrb[0].mxu0
        %v1915 = vadd.f32 %v1833, %v1914
        %1916 = vdwg.mxu0
        %v1917 = vand.u32 %v1829, 4294901760
        %v1918 = vsub.f32 %v1829, %v1917
        %v1919 = vand.u32 %v1918, 4294901760
        %v1920 = vsub.f32 %v1918, %v1919
        %v1921 = vand.u32 %v1920, 4294901760
        %1922 = vmatprep.subr.mxu0 %v1921
        %v1923 = vand.u32 %v1828, 4294901760
        %v1924 = vsub.f32 %v1828, %v1923
        %v1925 = vand.u32 %v1924, 4294901760
        %v1926 = vsub.f32 %v1924, %v1925
        %v1927 = vand.u32 %v1926, 4294901760
        %1928 = vmatpush1.msra.mxu0 %v1927
        %v1929 = vand.u32 %v1831, 4294901760
        %v1930 = vsub.f32 %v1831, %v1929
        %v1931 = vand.u32 %v1930, 4294901760
        %v1932 = vsub.f32 %v1930, %v1931
        %v1933 = vand.u32 %v1932, 4294901760
        %1934 = vmatprep.subr.mxu0 %v1933
        %v1935 = vand.u32 %v1830, 4294901760
        %v1936 = vsub.f32 %v1830, %v1935
        %v1937 = vand.u32 %v1936, 4294901760
        %v1938 = vsub.f32 %v1936, %v1937
        %v1939 = vand.u32 %v1938, 4294901760
        %1940 = vmatpush1.msra.mxu0 %v1939
        %1941 = vmatprep.subr.mxu0 0.0
        %1942 = vmatpush1.msra.mxu0 0.0
        %1943 = vmatprep.subr.mxu0 0.0
        %1944 = vmatpush1.msra.mxu0 0.0
        %1945 = vmatprep.subr.mxu0 0.0
        %1946 = vmatpush1.msra.mxu0 0.0
        %1947 = vmatprep.subr.mxu0 0.0
        %1948 = vmatpush1.msra.mxu0 0.0
        %1949 = vmatprep.subr.mxu0 0.0
        %1950 = vmatpush1.msra.mxu0 0.0
        %1951 = vmatprep.subr.mxu0 0.0
        %1952 = vmatpush1.msra.mxu0 0.0
        %1953 = vmatprep.subr.mxu0 0.0
        %1954 = vmatpush1.msra.mxu0 0.0
        %1955 = vmatprep.subr.mxu0 0.0
        %1956 = vmatpush1.msra.mxu0 0.0
        %1957 = vmatprep.subr.mxu0 0.0
        %1958 = vmatpush1.msra.mxu0 0.0
        %1959 = vmatprep.subr.mxu0 0.0
        %1960 = vmatpush1.msra.mxu0 0.0
        %1961 = vmatprep.subr.mxu0 0.0
        %1962 = vmatpush1.msra.mxu0 0.0
        %1963 = vmatprep.subr.mxu0 0.0
        %1964 = vmatpush1.msra.mxu0 0.0
        %1965 = vmatprep.subr.mxu0 0.0
        %1966 = vmatpush1.msra.mxu0 0.0
        %1967 = vmatprep.subr.mxu0 0.0
        %1968 = vmatpush1.msra.mxu0 0.0
        %1969 = vmatprep.subr.mxu0 0.0
        %1970 = vmatpush1.msra.mxu0 0.0
        %1971 = vmatprep.subr.mxu0 0.0
        %1972 = vmatpush1.msra.mxu0 0.0
        %1973 = vmatprep.subr.mxu0 0.0
        %1974 = vmatpush1.msra.mxu0 0.0
        %1975 = vmatprep.subr.mxu0 0.0
        %1976 = vmatpush1.msra.mxu0 0.0
        %1977 = vmatprep.subr.mxu0 0.0
        %1978 = vmatpush1.msra.mxu0 0.0
        %1979 = vmatprep.subr.mxu0 0.0
        %1980 = vmatpush1.msra.mxu0 0.0
        %1981 = vmatprep.subr.mxu0 0.0
        %1982 = vmatpush1.msra.mxu0 0.0
        %1983 = vmatprep.subr.mxu0 0.0
        %1984 = vmatpush1.msra.mxu0 0.0
        %1985 = vmatprep.subr.mxu0 0.0
        %1986 = vmatpush1.msra.mxu0 0.0
        %1987 = vmatprep.subr.mxu0 0.0
        %1988 = vmatpush1.msra.mxu0 0.0
        %1989 = vmatprep.subr.mxu0 0.0
        %1990 = vmatpush1.msra.mxu0 0.0
        %1991 = vmatprep.subr.mxu0 0.0
        %1992 = vmatpush1.msra.mxu0 0.0
        %1993 = vmatprep.subr.mxu0 0.0
        %1994 = vmatpush1.msra.mxu0 0.0
        %1995 = vmatprep.subr.mxu0 0.0
        %1996 = vmatpush1.msra.mxu0 0.0
        %1997 = vmatprep.subr.mxu0 0.0
        %1998 = vmatpush1.msra.mxu0 0.0
        %1999 = vmatprep.subr.mxu0 0.0
        %2000 = vmatpush1.msra.mxu0 0.0
        %2001 = vmatprep.mubr.f32.mxu0 0.0
        %v2002 = vand.u32 %v1835, 4294901760
        %2003 = vmatmul.mubr.f32.gmra.mrb[0].mxu0 %v2002
        %v2004 = vpop.f32.mrb[0].mxu0
        %v2005 = vadd.f32 %v1913, %v2004
        %v2006 = vpop.f32.mrb[0].mxu0
        %v2007 = vadd.f32 %v1915, %v2006
        %2008 = vdwg.mxu0
        %v2009 = vand.u32 %v1829, 4294901760
        %v2010 = vsub.f32 %v1829, %v2009
        %2011 = vmatprep.subr.mxu0 %v2010
        %v2012 = vand.u32 %v1828, 4294901760
        %v2013 = vsub.f32 %v1828, %v2012
        %2014 = vmatpush1.msra.mxu0 %v2013
        %v2015 = vand.u32 %v1831, 4294901760
        %v2016 = vsub.f32 %v1831, %v2015
        %2017 = vmatprep.subr.mxu0 %v2016
        %v2018 = vand.u32 %v1830, 4294901760
        %v2019 = vsub.f32 %v1830, %v2018
        %2020 = vmatpush1.msra.mxu0 %v2019
        %2021 = vmatprep.subr.mxu0 0.0
        %2022 = vmatpush1.msra.mxu0 0.0
        %2023 = vmatprep.subr.mxu0 0.0
        %2024 = vmatpush1.msra.mxu0 0.0
        %2025 = vmatprep.subr.mxu0 0.0
        %2026 = vmatpush1.msra.mxu0 0.0
        %2027 = vmatprep.subr.mxu0 0.0
        %2028 = vmatpush1.msra.mxu0 0.0
        %2029 = vmatprep.subr.mxu0 0.0
        %2030 = vmatpush1.msra.mxu0 0.0
        %2031 = vmatprep.subr.mxu0 0.0
        %2032 = vmatpush1.msra.mxu0 0.0
        %2033 = vmatprep.subr.mxu0 0.0
        %2034 = vmatpush1.msra.mxu0 0.0
        %2035 = vmatprep.subr.mxu0 0.0
        %2036 = vmatpush1.msra.mxu0 0.0
        %2037 = vmatprep.subr.mxu0 0.0
        %2038 = vmatpush1.msra.mxu0 0.0
        %2039 = vmatprep.subr.mxu0 0.0
        %2040 = vmatpush1.msra.mxu0 0.0
        %2041 = vmatprep.subr.mxu0 0.0
        %2042 = vmatpush1.msra.mxu0 0.0
        %2043 = vmatprep.subr.mxu0 0.0
        %2044 = vmatpush1.msra.mxu0 0.0
        %2045 = vmatprep.subr.mxu0 0.0
        %2046 = vmatpush1.msra.mxu0 0.0
        %2047 = vmatprep.subr.mxu0 0.0
        %2048 = vmatpush1.msra.mxu0 0.0
        %2049 = vmatprep.subr.mxu0 0.0
        %2050 = vmatpush1.msra.mxu0 0.0
        %2051 = vmatprep.subr.mxu0 0.0
        %2052 = vmatpush1.msra.mxu0 0.0
        %2053 = vmatprep.subr.mxu0 0.0
        %2054 = vmatpush1.msra.mxu0 0.0
        %2055 = vmatprep.subr.mxu0 0.0
        %2056 = vmatpush1.msra.mxu0 0.0
        %2057 = vmatprep.subr.mxu0 0.0
        %2058 = vmatpush1.msra.mxu0 0.0
        %2059 = vmatprep.subr.mxu0 0.0
        %2060 = vmatpush1.msra.mxu0 0.0
        %2061 = vmatprep.subr.mxu0 0.0
        %2062 = vmatpush1.msra.mxu0 0.0
        %2063 = vmatprep.subr.mxu0 0.0
        %2064 = vmatpush1.msra.mxu0 0.0
        %2065 = vmatprep.subr.mxu0 0.0
        %2066 = vmatpush1.msra.mxu0 0.0
        %2067 = vmatprep.subr.mxu0 0.0
        %2068 = vmatpush1.msra.mxu0 0.0
        %2069 = vmatprep.subr.mxu0 0.0
        %2070 = vmatpush1.msra.mxu0 0.0
        %2071 = vmatprep.subr.mxu0 0.0
        %2072 = vmatpush1.msra.mxu0 0.0
        %2073 = vmatprep.subr.mxu0 0.0
        %2074 = vmatpush1.msra.mxu0 0.0
        %2075 = vmatprep.subr.mxu0 0.0
        %2076 = vmatpush1.msra.mxu0 0.0
        %2077 = vmatprep.subr.mxu0 0.0
        %2078 = vmatpush1.msra.mxu0 0.0
        %2079 = vmatprep.subr.mxu0 0.0
        %2080 = vmatpush1.msra.mxu0 0.0
        %2081 = vmatprep.mubr.f32.mxu0 0.0
        %v2082 = vand.u32 %v1835, 4294901760
        %v2083 = vsub.f32 %v1835, %v2082
        %2084 = vmatmul.mubr.f32.gmra.mrb[0].mxu0 %v2083
        %v2085 = vpop.f32.mrb[0].mxu0
        %v2086 = vadd.f32 %v2005, %v2085
        %v2087 = vpop.f32.mrb[0].mxu0
        %v2088 = vadd.f32 %v2007, %v2087
        %2089 = vdwg.mxu0
        %v2090 = vand.u32 %v1829, 4294901760
        %2091 = vmatprep.subr.mxu0 %v2090
        %v2092 = vand.u32 %v1828, 4294901760
        %2093 = vmatpush1.msra.mxu0 %v2092
        %v2094 = vand.u32 %v1831, 4294901760
        %2095 = vmatprep.subr.mxu0 %v2094
        %v2096 = vand.u32 %v1830, 4294901760
        %2097 = vmatpush1.msra.mxu0 %v2096
        %2098 = vmatprep.subr.mxu0 0.0
        %2099 = vmatpush1.msra.mxu0 0.0
        %2100 = vmatprep.subr.mxu0 0.0
        %2101 = vmatpush1.msra.mxu0 0.0
        %2102 = vmatprep.subr.mxu0 0.0
        %2103 = vmatpush1.msra.mxu0 0.0
        %2104 = vmatprep.subr.mxu0 0.0
        %2105 = vmatpush1.msra.mxu0 0.0
        %2106 = vmatprep.subr.mxu0 0.0
        %2107 = vmatpush1.msra.mxu0 0.0
        %2108 = vmatprep.subr.mxu0 0.0
        %2109 = vmatpush1.msra.mxu0 0.0
        %2110 = vmatprep.subr.mxu0 0.0
        %2111 = vmatpush1.msra.mxu0 0.0
        %2112 = vmatprep.subr.mxu0 0.0
        %2113 = vmatpush1.msra.mxu0 0.0
        %2114 = vmatprep.subr.mxu0 0.0
        %2115 = vmatpush1.msra.mxu0 0.0
        %2116 = vmatprep.subr.mxu0 0.0
        %2117 = vmatpush1.msra.mxu0 0.0
        %2118 = vmatprep.subr.mxu0 0.0
        %2119 = vmatpush1.msra.mxu0 0.0
        %2120 = vmatprep.subr.mxu0 0.0
        %2121 = vmatpush1.msra.mxu0 0.0
        %2122 = vmatprep.subr.mxu0 0.0
        %2123 = vmatpush1.msra.mxu0 0.0
        %2124 = vmatprep.subr.mxu0 0.0
        %2125 = vmatpush1.msra.mxu0 0.0
        %2126 = vmatprep.subr.mxu0 0.0
        %2127 = vmatpush1.msra.mxu0 0.0
        %2128 = vmatprep.subr.mxu0 0.0
        %2129 = vmatpush1.msra.mxu0 0.0
        %2130 = vmatprep.subr.mxu0 0.0
        %2131 = vmatpush1.msra.mxu0 0.0
        %2132 = vmatprep.subr.mxu0 0.0
        %2133 = vmatpush1.msra.mxu0 0.0
        %2134 = vmatprep.subr.mxu0 0.0
        %2135 = vmatpush1.msra.mxu0 0.0
        %2136 = vmatprep.subr.mxu0 0.0
        %2137 = vmatpush1.msra.mxu0 0.0
        %2138 = vmatprep.subr.mxu0 0.0
        %2139 = vmatpush1.msra.mxu0 0.0
        %2140 = vmatprep.subr.mxu0 0.0
        %2141 = vmatpush1.msra.mxu0 0.0
        %2142 = vmatprep.subr.mxu0 0.0
        %2143 = vmatpush1.msra.mxu0 0.0
        %2144 = vmatprep.subr.mxu0 0.0
        %2145 = vmatpush1.msra.mxu0 0.0
        %2146 = vmatprep.subr.mxu0 0.0
        %2147 = vmatpush1.msra.mxu0 0.0
        %2148 = vmatprep.subr.mxu0 0.0
        %2149 = vmatpush1.msra.mxu0 0.0
        %2150 = vmatprep.subr.mxu0 0.0
        %2151 = vmatpush1.msra.mxu0 0.0
        %2152 = vmatprep.subr.mxu0 0.0
        %2153 = vmatpush1.msra.mxu0 0.0
        %2154 = vmatprep.subr.mxu0 0.0
        %2155 = vmatpush1.msra.mxu0 0.0
        %2156 = vmatprep.subr.mxu0 0.0
        %2157 = vmatpush1.msra.mxu0 0.0
        %2158 = vmatprep.mubr.f32.mxu0 0.0
        %v2159 = vand.u32 %v1835, 4294901760
        %v2160 = vsub.f32 %v1835, %v2159
        %v2161 = vand.u32 %v2160, 4294901760
        %2162 = vmatmul.mubr.f32.gmra.mrb[0].mxu0 %v2161
        %v2163 = vpop.f32.mrb[0].mxu0
        %v2164 = vadd.f32 %v2086, %v2163
        %v2165 = vpop.f32.mrb[0].mxu0
        %v2166 = vadd.f32 %v2088, %v2165
        %2167 = vdwg.mxu0
        %v2168 = vand.u32 %v1829, 4294901760
        %v2169 = vsub.f32 %v1829, %v2168
        %v2170 = vand.u32 %v2169, 4294901760
        %2171 = vmatprep.subr.mxu0 %v2170
        %v2172 = vand.u32 %v1828, 4294901760
        %v2173 = vsub.f32 %v1828, %v2172
        %v2174 = vand.u32 %v2173, 4294901760
        %2175 = vmatpush1.msra.mxu0 %v2174
        %v2176 = vand.u32 %v1831, 4294901760
        %v2177 = vsub.f32 %v1831, %v2176
        %v2178 = vand.u32 %v2177, 4294901760
        %2179 = vmatprep.subr.mxu0 %v2178
        %v2180 = vand.u32 %v1830, 4294901760
        %v2181 = vsub.f32 %v1830, %v2180
        %v2182 = vand.u32 %v2181, 4294901760
        %2183 = vmatpush1.msra.mxu0 %v2182
        %2184 = vmatprep.subr.mxu0 0.0
        %2185 = vmatpush1.msra.mxu0 0.0
        %2186 = vmatprep.subr.mxu0 0.0
        %2187 = vmatpush1.msra.mxu0 0.0
        %2188 = vmatprep.subr.mxu0 0.0
        %2189 = vmatpush1.msra.mxu0 0.0
        %2190 = vmatprep.subr.mxu0 0.0
        %2191 = vmatpush1.msra.mxu0 0.0
        %2192 = vmatprep.subr.mxu0 0.0
        %2193 = vmatpush1.msra.mxu0 0.0
        %2194 = vmatprep.subr.mxu0 0.0
        %2195 = vmatpush1.msra.mxu0 0.0
        %2196 = vmatprep.subr.mxu0 0.0
        %2197 = vmatpush1.msra.mxu0 0.0
        %2198 = vmatprep.subr.mxu0 0.0
        %2199 = vmatpush1.msra.mxu0 0.0
        %2200 = vmatprep.subr.mxu0 0.0
        %2201 = vmatpush1.msra.mxu0 0.0
        %2202 = vmatprep.subr.mxu0 0.0
        %2203 = vmatpush1.msra.mxu0 0.0
        %2204 = vmatprep.subr.mxu0 0.0
        %2205 = vmatpush1.msra.mxu0 0.0
        %2206 = vmatprep.subr.mxu0 0.0
        %2207 = vmatpush1.msra.mxu0 0.0
        %2208 = vmatprep.subr.mxu0 0.0
        %2209 = vmatpush1.msra.mxu0 0.0
        %2210 = vmatprep.subr.mxu0 0.0
        %2211 = vmatpush1.msra.mxu0 0.0
        %2212 = vmatprep.subr.mxu0 0.0
        %2213 = vmatpush1.msra.mxu0 0.0
        %2214 = vmatprep.subr.mxu0 0.0
        %2215 = vmatpush1.msra.mxu0 0.0
        %2216 = vmatprep.subr.mxu0 0.0
        %2217 = vmatpush1.msra.mxu0 0.0
        %2218 = vmatprep.subr.mxu0 0.0
        %2219 = vmatpush1.msra.mxu0 0.0
        %2220 = vmatprep.subr.mxu0 0.0
        %2221 = vmatpush1.msra.mxu0 0.0
        %2222 = vmatprep.subr.mxu0 0.0
        %2223 = vmatpush1.msra.mxu0 0.0
        %2224 = vmatprep.subr.mxu0 0.0
        %2225 = vmatpush1.msra.mxu0 0.0
        %2226 = vmatprep.subr.mxu0 0.0
        %2227 = vmatpush1.msra.mxu0 0.0
        %2228 = vmatprep.subr.mxu0 0.0
        %2229 = vmatpush1.msra.mxu0 0.0
        %2230 = vmatprep.subr.mxu0 0.0
        %2231 = vmatpush1.msra.mxu0 0.0
        %2232 = vmatprep.subr.mxu0 0.0
        %2233 = vmatpush1.msra.mxu0 0.0
        %2234 = vmatprep.subr.mxu0 0.0
        %2235 = vmatpush1.msra.mxu0 0.0
        %2236 = vmatprep.subr.mxu0 0.0
        %2237 = vmatpush1.msra.mxu0 0.0
        %2238 = vmatprep.subr.mxu0 0.0
        %2239 = vmatpush1.msra.mxu0 0.0
        %2240 = vmatprep.subr.mxu0 0.0
        %2241 = vmatpush1.msra.mxu0 0.0
        %2242 = vmatprep.subr.mxu0 0.0
        %2243 = vmatpush1.msra.mxu0 0.0
        %2244 = vmatprep.mubr.f32.mxu0 0.0
        %v2245 = vand.u32 %v1835, 4294901760
        %2246 = vmatmul.mubr.f32.gmra.mrb[0].mxu0 %v2245
        %v2247 = vpop.f32.mrb[0].mxu0
        %v2248 = vadd.f32 %v2164, %v2247
        %v2249 = vpop.f32.mrb[0].mxu0
        %v2250 = vadd.f32 %v2166, %v2249
        %2251 = vdwg.mxu0
        %v2252 = vand.u32 %v1829, 4294901760
        %2253 = vmatprep.subr.mxu0 %v2252
        %v2254 = vand.u32 %v1828, 4294901760
        %2255 = vmatpush1.msra.mxu0 %v2254
        %v2256 = vand.u32 %v1831, 4294901760
        %2257 = vmatprep.subr.mxu0 %v2256
        %v2258 = vand.u32 %v1830, 4294901760
        %2259 = vmatpush1.msra.mxu0 %v2258
        %2260 = vmatprep.subr.mxu0 0.0
        %2261 = vmatpush1.msra.mxu0 0.0
        %2262 = vmatprep.subr.mxu0 0.0
        %2263 = vmatpush1.msra.mxu0 0.0
        %2264 = vmatprep.subr.mxu0 0.0
        %2265 = vmatpush1.msra.mxu0 0.0
        %2266 = vmatprep.subr.mxu0 0.0
        %2267 = vmatpush1.msra.mxu0 0.0
        %2268 = vmatprep.subr.mxu0 0.0
        %2269 = vmatpush1.msra.mxu0 0.0
        %2270 = vmatprep.subr.mxu0 0.0
        %2271 = vmatpush1.msra.mxu0 0.0
        %2272 = vmatprep.subr.mxu0 0.0
        %2273 = vmatpush1.msra.mxu0 0.0
        %2274 = vmatprep.subr.mxu0 0.0
        %2275 = vmatpush1.msra.mxu0 0.0
        %2276 = vmatprep.subr.mxu0 0.0
        %2277 = vmatpush1.msra.mxu0 0.0
        %2278 = vmatprep.subr.mxu0 0.0
        %2279 = vmatpush1.msra.mxu0 0.0
        %2280 = vmatprep.subr.mxu0 0.0
        %2281 = vmatpush1.msra.mxu0 0.0
        %2282 = vmatprep.subr.mxu0 0.0
        %2283 = vmatpush1.msra.mxu0 0.0
        %2284 = vmatprep.subr.mxu0 0.0
        %2285 = vmatpush1.msra.mxu0 0.0
        %2286 = vmatprep.subr.mxu0 0.0
        %2287 = vmatpush1.msra.mxu0 0.0
        %2288 = vmatprep.subr.mxu0 0.0
        %2289 = vmatpush1.msra.mxu0 0.0
        %2290 = vmatprep.subr.mxu0 0.0
        %2291 = vmatpush1.msra.mxu0 0.0
        %2292 = vmatprep.subr.mxu0 0.0
        %2293 = vmatpush1.msra.mxu0 0.0
        %2294 = vmatprep.subr.mxu0 0.0
        %2295 = vmatpush1.msra.mxu0 0.0
        %2296 = vmatprep.subr.mxu0 0.0
        %2297 = vmatpush1.msra.mxu0 0.0
        %2298 = vmatprep.subr.mxu0 0.0
        %2299 = vmatpush1.msra.mxu0 0.0
        %2300 = vmatprep.subr.mxu0 0.0
        %2301 = vmatpush1.msra.mxu0 0.0
        %2302 = vmatprep.subr.mxu0 0.0
        %2303 = vmatpush1.msra.mxu0 0.0
        %2304 = vmatprep.subr.mxu0 0.0
        %2305 = vmatpush1.msra.mxu0 0.0
        %2306 = vmatprep.subr.mxu0 0.0
        %2307 = vmatpush1.msra.mxu0 0.0
        %2308 = vmatprep.subr.mxu0 0.0
        %2309 = vmatpush1.msra.mxu0 0.0
        %2310 = vmatprep.subr.mxu0 0.0
        %2311 = vmatpush1.msra.mxu0 0.0
        %2312 = vmatprep.subr.mxu0 0.0
        %2313 = vmatpush1.msra.mxu0 0.0
        %2314 = vmatprep.subr.mxu0 0.0
        %2315 = vmatpush1.msra.mxu0 0.0
        %2316 = vmatprep.subr.mxu0 0.0
        %2317 = vmatpush1.msra.mxu0 0.0
        %2318 = vmatprep.subr.mxu0 0.0
        %2319 = vmatpush1.msra.mxu0 0.0
        %2320 = vmatprep.mubr.f32.mxu0 0.0
        %v2321 = vand.u32 %v1835, 4294901760
        %2322 = vmatmul.mubr.f32.gmra.mrb[0].mxu0 %v2321
        %v2323 = vpop.f32.mrb[0].mxu0
        %v2324 = vadd.f32 %v2248, %v2323
        %v2325 = vpop.f32.mrb[0].mxu0
        %v2326 = vadd.f32 %v2250, %v2325
        %2327 = vdwg.mxu0
        %v2330 = vcombine.low %v2324, %v2326
        %v2332 = vunpack.c.l.s4 1966171168
        %v2333 = vunpack.c.0.s8 %v2332
        %v2334 = vlaneseq
        %v2335 = vshrl.u32 %v2334, 7
        %v2336 = vsub.s32 %v2333, %v2335
        %v2337 = vrot.slane %v2330, %v2336
        %v2339 = vunpack.c.l.s4 1966171168
        %v2340 = vunpack.c.0.s8 %v2339
        %v2341 = vlaneseq
        %v2342 = vshrl.u32 %v2341, 7
        %v2343 = vsub.s32 %v2340, %v2342
        %v2344 = vrot.slane %v2337, %v2343
        %v2346 = vlaneseq
        %vm2347 = vcmp.ge.s32.totalorder %v2346, 0
        %vm2348 = vcmp.lt.s32.totalorder %v2346, 256
        %vm2349 = vmand %vm2347, %vm2348
        %2350 = vst.msk [vmem:[%s318] sm:$0x3] %vm2349, %v2344
        %p2351 = scmp.lt.s32.totalorder %s21, 1
        %s2352 = scalar_select %p2351, %s21, 1
        %s2353 = smul.addr %s2352, 2
        %s2354 = scalar_lea.vmem %s8, %s2353
        // Predicated region
        $region57: #{simpler_fcn_forward.1} parent=51 // pred_check
          %p2355 = pneg %p212
        $region58: #{simpler_fcn_forward.1} parent=51 // pred_check_branch
          %2357 = sbr.rel (%p2355) target = $region60
        $region59: #{simpler_fcn_forward.1} parent=51 // pred_region
          _
        $region60: #{simpler_fcn_forward.1} parent=51 // pred_fallthru
          _
      $region52: #{simpler_fcn_forward.1} parent=5 // pred_fallthru
        _
      %p2358 = scmp.le.s32.totalorder 2, %s16
      // Predicated region
      $region61: #{simpler_fcn_forward.1} parent=5 // pred_check
        %p2359 = pneg %p2358
      $region62: #{simpler_fcn_forward.1} parent=5 // pred_check_branch
        %2361 = sbr.rel (%p2359) target = $region64
      $region63: #{simpler_fcn_forward.1} parent=5 // pred_region
        %s2362 = ssub.s32 %s16, 2
        // Predicated region
        $region65: #{simpler_fcn_forward.1} parent=63 // pred_check
          %p2363 = pneg %p218
        $region66: #{simpler_fcn_forward.1} parent=63 // pred_check_branch
          %2365 = sbr.rel (%p2363) target = $region68
        $region67: #{simpler_fcn_forward.1} parent=63 // pred_region
          %p2366 = scmp.lt.s32.totalorder %s22, 1
          %s2367 = scalar_select %p2366, %s22, 1
          %s2368 = smul.addr %s2367, 2
          %s2369 = scalar_lea.vmem %s8, %s2368
        $region68: #{simpler_fcn_forward.1} parent=63 // pred_fallthru
          _
      $region64: #{simpler_fcn_forward.1} parent=5 // pred_fallthru
        _
    $region6: #{simpler_fcn_forward.1} parent=1 // loop_footer
      %s20 = sadd.s32 1, %s16
    $region7: #{simpler_fcn_forward.1} parent=1 // loop_footer_branch
      %15 = sbr.rel target = $region3
    $region8: #{simpler_fcn_forward.1} parent=1 // loop_exit
      _
    %2370 = vsyncpa [#allocation4], 1
    %s2371 = scalar_lea.sflag [#allocation4], 1
    %2372 = vsyncpa %s2371, 1

</llo_original>
